<compile_context>
chip_gen: v7x
topology: tpu7x:2x2x1
jax: 0.10.0
libtpu: 0.0.40
codegen_flags: <defaults>
</compile_context>

<pallas_src>
import jax
import jax.numpy as jnp
from jax.experimental import pallas as pl
from jax.experimental.pallas import tpu as pltpu

NEG_SLOPE = 0.01   # F.leaky_relu default
LN_EPS = 1e-5      # nn.LayerNorm default


def _act_and_norm(z, gamma, beta):
    """LeakyReLU -> (dropout = identity, eval) -> LayerNorm over the feature axis
    (axis 0 in the transposed layout).  gamma/beta are [hidden, 1] columns."""
    z = jnp.where(z > 0, z, NEG_SLOPE * z)
    mu = jnp.mean(z, axis=0, keepdims=True)                               # [1, E_tile]
    var = jnp.maximum(jnp.mean(z * z, axis=0, keepdims=True) - mu * mu, 0.0)
    return (z - mu) * jax.lax.rsqrt(var + LN_EPS) * gamma + beta


def _make_fnn_kernel(num_layers):
    """Kernel refs:
       (y_ref,                                   # [input_dim, E_tile]
        w_0 .. w_{num_layers-1},                 # [out_i, in_i]  (nn.Linear layout)
        vecs_ref,                                # [n_hidden, hidden, 3] = (bias, gamma, beta)
        b_last_ref,                              # [out_dim, 1]
        out_ref)                                 # [out_dim, E_tile]  (lane dense)
    """
    n_hidden = num_layers - 1

    def kernel(*refs):
        y_ref = refs[0]
        w_refs = refs[1:1 + num_layers]
        vecs_ref = refs[1 + num_layers]
        b_last_ref = refs[2 + num_layers]
        out_ref = refs[3 + num_layers]

        h = y_ref[...].astype(jnp.float32)            # [input_dim, E_tile]
        input_dim = h.shape[0]

        # ---- layer 0: K == input_dim is tiny -> VPU broadcast-MACs, skip the MXU ----
        w0 = w_refs[0][...]                           # [hidden, input_dim]
        v0 = vecs_ref[0]                              # [hidden, 3]
        z = w0[:, 0:1] * h[0:1, :]
        for k in range(1, input_dim):
            z = z + w0[:, k:k + 1] * h[k:k + 1, :]
        z = z + v0[:, 0:1]
        h = _act_and_norm(z, v0[:, 1:2], v0[:, 2:3])

        # ---- remaining hidden layers on the MXU (N = E_tile, large) ----
        for i in range(1, n_hidden):
            w = w_refs[i][...]                        # [hidden, hidden]
            v = vecs_ref[i]                           # [hidden, 3]
            z = jnp.dot(w, h, preferred_element_type=jnp.float32) + v[:, 0:1]
            h = _act_and_norm(z, v[:, 1:2], v[:, 2:3])

        # ---- final Linear + ReLU, lane-dense [out_dim, E_tile] store ----
        w_last = w_refs[num_layers - 1][...]          # [out_dim, hidden]
        out = jnp.dot(w_last, h, preferred_element_type=jnp.float32) + b_last_ref[...]
        out_ref[...] = jnp.maximum(out, 0.0)

    return kernel


def fnn_forward(yT, wts, vecs, b_last, *, tile_e=512):
    """yT: [input_dim, E] float32 (transposed input).  wts[i]: [out_i, in_i].
    vecs: [n_hidden, hidden, 3].  b_last: [out_dim, 1].  Returns [out_dim, E] float32."""
    input_dim, E = yT.shape
    num_layers = len(wts)
    out_dim = wts[-1].shape[0]

    # Lane axis must be a multiple of 128; keep the tile no larger than needed.
    tile_e = max(128, ((min(tile_e, max(E, 1)) + 127) // 128) * 128)
    E_pad = pl.cdiv(E, tile_e) * tile_e
    if E_pad != E:
        yT = jnp.pad(yT, ((0, 0), (0, E_pad - E)))    # zero cols are discarded at the end

    def full_spec(p):
        return pl.BlockSpec(p.shape, lambda i, _nd=p.ndim: (0,) * _nd)

    in_specs = [pl.BlockSpec((input_dim, tile_e), lambda i: (0, i))]
    in_specs += [full_spec(w) for w in wts]
    in_specs += [full_spec(vecs), full_spec(b_last)]
    out_specs = pl.BlockSpec((out_dim, tile_e), lambda i: (0, i))

    out = pl.pallas_call(
        _make_fnn_kernel(num_layers),
        out_shape=jax.ShapeDtypeStruct((out_dim, E_pad), jnp.float32),
        grid_spec=pltpu.PrefetchScalarGridSpec(
            num_scalar_prefetch=0,
            grid=(E_pad // tile_e,),
            in_specs=in_specs,
            out_specs=out_specs,
        ),
        compiler_params=pltpu.CompilerParams(
            dimension_semantics=("parallel",),   # edge tiles shard across v7x's 2 TCs
            # Padded, double-buffered footprint is < 1 MiB even at tile_e = 2048;
            # 32 MiB is safely inside scoped VMEM on v5e/v6e (128 MiB) and v7x (64 MiB).
            vmem_limit_bytes=32 * 1024 * 1024,
        ),
    )(yT, *wts, vecs, b_last)
    return out[:, :E]


def fnn_v0_apply(x_s, x_t, edge_index, edge_weight, wts, vecs, b_last, *, tile_e=512):
    # Gather + concat glue in plain JAX, built directly in the transposed [features, E] layout.
    x_s_d = x_s[:, 1][edge_index[0]]                  # [E]
    x_s_c = x_t[:, 1][edge_index[1]]                  # [E]
    yT = jnp.concatenate(
        [x_s_d[None, :], x_s_c[None, :], jnp.transpose(edge_weight)], axis=0)  # [input_dim, E]
    out = fnn_forward(yT, wts, vecs, b_last, tile_e=tile_e)                     # [out_dim, E]
    return jnp.squeeze(jnp.transpose(out))            # matches torch .squeeze()


def init_params(key, input_dim, hidden_dim, output_dim, num_layers):
    """Synthetic init mirroring nn.Linear ([out, in] weights, uniform(+-1/sqrt(fan_in)))
    and nn.LayerNorm (gamma=1, beta=0), packed for the transposed kernel."""
    dims = [input_dim] + [hidden_dim] * (num_layers - 1) + [output_dim]
    n_hidden = num_layers - 1
    keys = jax.random.split(key, 2 * num_layers)
    wts, biases = [], []
    for i in range(num_layers):
        bound = 1.0 / (dims[i] ** 0.5)
        w = jax.random.uniform(keys[2 * i], (dims[i + 1], dims[i]), jnp.float32, -bound, bound)
        b = jax.random.uniform(keys[2 * i + 1], (dims[i + 1],), jnp.float32, -bound, bound)
        wts.append(w)
        biases.append(b)
    vecs = jnp.stack(
        [jnp.stack([biases[i],
                    jnp.ones((hidden_dim,), jnp.float32),
                    jnp.zeros((hidden_dim,), jnp.float32)], axis=-1)
         for i in range(n_hidden)], axis=0)            # [n_hidden, hidden, 3]
    b_last = biases[-1][:, None]                       # [out_dim, 1]
    return wts, vecs, b_last


def reference_forward(x_s, x_t, edge_index, edge_weight, wts, vecs, b_last):
    """Pure-JAX reference (standard row layout) for correctness checking."""
    x_s_d = x_s[:, 1][edge_index[0]][:, None]
    x_s_c = x_t[:, 1][edge_index[1]][:, None]
    y = jnp.concatenate([x_s_d, x_s_c, edge_weight], axis=1)
    h = y
    n_hidden = len(wts) - 1
    for i in range(n_hidden):
        h = h @ wts[i].T + vecs[i, :, 0]
        h = jnp.where(h > 0, h, NEG_SLOPE * h)
        mu = jnp.mean(h, axis=-1, keepdims=True)
        var = jnp.mean((h - mu) ** 2, axis=-1, keepdims=True)
        h = (h - mu) / jnp.sqrt(var + LN_EPS) * vecs[i, :, 1] + vecs[i, :, 2]
    out = h @ wts[-1].T + b_last[:, 0]
    return jnp.squeeze(jnp.maximum(out, 0.0))


if __name__ == "__main__":
    # Small synthetic problem consistent with the module's forward:
    #   x_s: [N_s, F_s], x_t: [N_t, F_t], edge_index: [2, E], edge_weight: [E, W]
    #   input_dim = 2 + W
    num_layers = 3
    hidden_dim = 32
    output_dim = 1
    W = 2
    input_dim = 2 + W
    N_s, N_t, E = 16, 16, 2000   # E not a multiple of the tile -> exercises the pad path
    tile_e = 512                 # -> 4 grid steps: keeps both v7x TensorCores busy

    key = jax.random.PRNGKey(0)
    k_xs, k_xt, k_ei0, k_ei1, k_ew, k_params = jax.random.split(key, 6)

    x_s = jax.random.normal(k_xs, (N_s, 4), jnp.float32)
    x_t = jax.random.normal(k_xt, (N_t, 4), jnp.float32)
    edge_index = jnp.stack([
        jax.random.randint(k_ei0, (E,), 0, N_s),
        jax.random.randint(k_ei1, (E,), 0, N_t),
    ], axis=0)
    edge_weight = jax.random.normal(k_ew, (E, W), jnp.float32)

    wts, vecs, b_last = init_params(k_params, input_dim, hidden_dim, output_dim, num_layers)

    out = fnn_v0_apply(x_s, x_t, edge_index, edge_weight, wts, vecs, b_last, tile_e=tile_e)
    out = jax.block_until_ready(out)

    ref = reference_forward(x_s, x_t, edge_index, edge_weight, wts, vecs, b_last)
    assert out.shape == (E,), out.shape
    max_err = float(jnp.max(jnp.abs(out - ref)))
    assert jnp.allclose(out, ref, atol=2e-4, rtol=2e-4), max_err

    print("KERNEL_OK")
</pallas_src>

<mosaic_0001>
module attributes {stable_mosaic.version = 11 : i64} {
  func.func @kernel(%arg0: i32, %arg1: memref<4x512xf32, #tpu.memory_space<vmem>>, %arg2: memref<32x4xf32, #tpu.memory_space<vmem>>, %arg3: memref<32x32xf32, #tpu.memory_space<vmem>>, %arg4: memref<1x32xf32, #tpu.memory_space<vmem>>, %arg5: memref<2x32x3xf32, #tpu.memory_space<vmem>>, %arg6: memref<1x1xf32, #tpu.memory_space<vmem>>, %arg7: memref<1x512xf32, #tpu.memory_space<vmem>>) attributes {dimension_semantics = [#tpu.dimension_semantics<parallel>], iteration_bounds = array<i64: 4>, scalar_prefetch = 0 : i64, scratch_operands = 0 : i64, tpu.core_type = #tpu.core_type<tc>, window_params = [{transform_indices = @transform_0, window_bounds = array<i64: 4, 512>}, {pipeline_mode = #tpu.pipeline_mode<synchronous>, transform_indices = @transform_1, window_bounds = array<i64: 32, 4>}, {pipeline_mode = #tpu.pipeline_mode<synchronous>, transform_indices = @transform_2, window_bounds = array<i64: 32, 32>}, {pipeline_mode = #tpu.pipeline_mode<synchronous>, transform_indices = @transform_3, window_bounds = array<i64: 1, 32>}, {pipeline_mode = #tpu.pipeline_mode<synchronous>, transform_indices = @transform_4, window_bounds = array<i64: 2, 32, 3>}, {pipeline_mode = #tpu.pipeline_mode<synchronous>, transform_indices = @transform_5, window_bounds = array<i64: 1, 1>}, {transform_indices = @transform_6, window_bounds = array<i64: 1, 512>}]} {
    %c0 = arith.constant 0 : index
    %c0_0 = arith.constant 0 : index
    %0 = vector.load %arg1[%c0, %c0_0] : memref<4x512xf32, #tpu.memory_space<vmem>>, vector<4x512xf32>
    %c0_1 = arith.constant 0 : index
    %c0_2 = arith.constant 0 : index
    %1 = vector.load %arg2[%c0_1, %c0_2] : memref<32x4xf32, #tpu.memory_space<vmem>>, vector<32x4xf32>
    %c0_3 = arith.constant 0 : index
    %c0_4 = arith.constant 0 : index
    %c0_5 = arith.constant 0 : index
    %2 = vector.load %arg5[%c0_3, %c0_4, %c0_5] : memref<2x32x3xf32, #tpu.memory_space<vmem>>, vector<1x32x3xf32>
    %3 = vector.shape_cast %2 : vector<1x32x3xf32> to vector<32x3xf32>
    %4 = vector.extract_strided_slice %1 {offsets = [0, 0], sizes = [32, 1], strides = [1, 1]} : vector<32x4xf32> to vector<32x1xf32>
    %5 = vector.extract_strided_slice %0 {offsets = [0, 0], sizes = [1, 512], strides = [1, 1]} : vector<4x512xf32> to vector<1x512xf32>
    %6 = vector.broadcast %4 : vector<32x1xf32> to vector<32x512xf32>
    %7 = vector.broadcast %5 : vector<1x512xf32> to vector<32x512xf32>
    %8 = arith.mulf %6, %7 : vector<32x512xf32>
    %9 = vector.extract_strided_slice %1 {offsets = [0, 1], sizes = [32, 1], strides = [1, 1]} : vector<32x4xf32> to vector<32x1xf32>
    %10 = vector.extract_strided_slice %0 {offsets = [1, 0], sizes = [1, 512], strides = [1, 1]} : vector<4x512xf32> to vector<1x512xf32>
    %11 = vector.broadcast %9 : vector<32x1xf32> to vector<32x512xf32>
    %12 = vector.broadcast %10 : vector<1x512xf32> to vector<32x512xf32>
    %13 = arith.mulf %11, %12 : vector<32x512xf32>
    %14 = arith.addf %8, %13 : vector<32x512xf32>
    %15 = vector.extract_strided_slice %1 {offsets = [0, 2], sizes = [32, 1], strides = [1, 1]} : vector<32x4xf32> to vector<32x1xf32>
    %16 = vector.extract_strided_slice %0 {offsets = [2, 0], sizes = [1, 512], strides = [1, 1]} : vector<4x512xf32> to vector<1x512xf32>
    %17 = vector.broadcast %15 : vector<32x1xf32> to vector<32x512xf32>
    %18 = vector.broadcast %16 : vector<1x512xf32> to vector<32x512xf32>
    %19 = arith.mulf %17, %18 : vector<32x512xf32>
    %20 = arith.addf %14, %19 : vector<32x512xf32>
    %21 = vector.extract_strided_slice %1 {offsets = [0, 3], sizes = [32, 1], strides = [1, 1]} : vector<32x4xf32> to vector<32x1xf32>
    %22 = vector.extract_strided_slice %0 {offsets = [3, 0], sizes = [1, 512], strides = [1, 1]} : vector<4x512xf32> to vector<1x512xf32>
    %23 = vector.broadcast %21 : vector<32x1xf32> to vector<32x512xf32>
    %24 = vector.broadcast %22 : vector<1x512xf32> to vector<32x512xf32>
    %25 = arith.mulf %23, %24 : vector<32x512xf32>
    %26 = arith.addf %20, %25 : vector<32x512xf32>
    %27 = vector.extract_strided_slice %3 {offsets = [0, 0], sizes = [32, 1], strides = [1, 1]} : vector<32x3xf32> to vector<32x1xf32>
    %28 = vector.broadcast %27 : vector<32x1xf32> to vector<32x512xf32>
    %29 = arith.addf %26, %28 : vector<32x512xf32>
    %30 = vector.extract_strided_slice %3 {offsets = [0, 1], sizes = [32, 1], strides = [1, 1]} : vector<32x3xf32> to vector<32x1xf32>
    %31 = vector.extract_strided_slice %3 {offsets = [0, 2], sizes = [32, 1], strides = [1, 1]} : vector<32x3xf32> to vector<32x1xf32>
    %cst = arith.constant 0.000000e+00 : f32
    %32 = vector.broadcast %cst : f32 to vector<32x512xf32>
    %33 = arith.cmpf ogt, %29, %32 : vector<32x512xf32>
    %cst_6 = arith.constant 0.00999999977 : f32
    %34 = vector.broadcast %cst_6 : f32 to vector<32x512xf32>
    %35 = arith.mulf %34, %29 : vector<32x512xf32>
    %36 = arith.select %33, %29, %35 : vector<32x512xi1>, vector<32x512xf32>
    %cst_7 = arith.constant dense<0.000000e+00> : vector<512xf32>
    %37 = vector.multi_reduction <add>, %36, %cst_7 [0] : vector<32x512xf32> to vector<512xf32>
    %38 = vector.shape_cast %37 : vector<512xf32> to vector<1x512xf32>
    %cst_8 = arith.constant 3.200000e+01 : f32
    %39 = vector.broadcast %cst_8 : f32 to vector<1x512xf32>
    %40 = arith.divf %38, %39 : vector<1x512xf32>
    %41 = arith.mulf %36, %36 : vector<32x512xf32>
    %cst_9 = arith.constant dense<0.000000e+00> : vector<512xf32>
    %42 = vector.multi_reduction <add>, %41, %cst_9 [0] : vector<32x512xf32> to vector<512xf32>
    %43 = vector.shape_cast %42 : vector<512xf32> to vector<1x512xf32>
    %cst_10 = arith.constant 3.200000e+01 : f32
    %44 = vector.broadcast %cst_10 : f32 to vector<1x512xf32>
    %45 = arith.divf %43, %44 : vector<1x512xf32>
    %46 = arith.mulf %40, %40 : vector<1x512xf32>
    %47 = arith.subf %45, %46 : vector<1x512xf32>
    %cst_11 = arith.constant 0.000000e+00 : f32
    %48 = vector.broadcast %cst_11 : f32 to vector<1x512xf32>
    %49 = arith.maximumf %47, %48 : vector<1x512xf32>
    %50 = vector.broadcast %40 : vector<1x512xf32> to vector<32x512xf32>
    %51 = arith.subf %36, %50 : vector<32x512xf32>
    %cst_12 = arith.constant 9.99999974E-6 : f32
    %52 = vector.broadcast %cst_12 : f32 to vector<1x512xf32>
    %53 = arith.addf %49, %52 : vector<1x512xf32>
    %54 = math.rsqrt %53 : vector<1x512xf32>
    %55 = vector.broadcast %54 : vector<1x512xf32> to vector<32x512xf32>
    %56 = arith.mulf %51, %55 : vector<32x512xf32>
    %57 = vector.broadcast %30 : vector<32x1xf32> to vector<32x512xf32>
    %58 = arith.mulf %56, %57 : vector<32x512xf32>
    %59 = vector.broadcast %31 : vector<32x1xf32> to vector<32x512xf32>
    %60 = arith.addf %58, %59 : vector<32x512xf32>
    %c0_13 = arith.constant 0 : index
    %c0_14 = arith.constant 0 : index
    %61 = vector.load %arg3[%c0_13, %c0_14] : memref<32x32xf32, #tpu.memory_space<vmem>>, vector<32x32xf32>
    %c1 = arith.constant 1 : index
    %c0_15 = arith.constant 0 : index
    %c0_16 = arith.constant 0 : index
    %62 = vector.load %arg5[%c1, %c0_15, %c0_16] : memref<2x32x3xf32, #tpu.memory_space<vmem>>, vector<1x32x3xf32>
    %63 = vector.shape_cast %62 : vector<1x32x3xf32> to vector<32x3xf32>
    %cst_17 = arith.constant dense<0.000000e+00> : vector<32x512xf32>
    %64 = tpu.matmul %61, %60, %cst_17 {dimension_numbers = #tpu.dot_dimension_numbers<[1], [0], [0], [1], [0, 0, 1, 1], [], []>} : vector<32x32xf32>, vector<32x512xf32>, vector<32x512xf32> -> vector<32x512xf32>
    %65 = vector.extract_strided_slice %63 {offsets = [0, 0], sizes = [32, 1], strides = [1, 1]} : vector<32x3xf32> to vector<32x1xf32>
    %66 = vector.broadcast %65 : vector<32x1xf32> to vector<32x512xf32>
    %67 = arith.addf %64, %66 : vector<32x512xf32>
    %68 = vector.extract_strided_slice %63 {offsets = [0, 1], sizes = [32, 1], strides = [1, 1]} : vector<32x3xf32> to vector<32x1xf32>
    %69 = vector.extract_strided_slice %63 {offsets = [0, 2], sizes = [32, 1], strides = [1, 1]} : vector<32x3xf32> to vector<32x1xf32>
    %cst_18 = arith.constant 0.000000e+00 : f32
    %70 = vector.broadcast %cst_18 : f32 to vector<32x512xf32>
    %71 = arith.cmpf ogt, %67, %70 : vector<32x512xf32>
    %cst_19 = arith.constant 0.00999999977 : f32
    %72 = vector.broadcast %cst_19 : f32 to vector<32x512xf32>
    %73 = arith.mulf %72, %67 : vector<32x512xf32>
    %74 = arith.select %71, %67, %73 : vector<32x512xi1>, vector<32x512xf32>
    %cst_20 = arith.constant dense<0.000000e+00> : vector<512xf32>
    %75 = vector.multi_reduction <add>, %74, %cst_20 [0] : vector<32x512xf32> to vector<512xf32>
    %76 = vector.shape_cast %75 : vector<512xf32> to vector<1x512xf32>
    %cst_21 = arith.constant 3.200000e+01 : f32
    %77 = vector.broadcast %cst_21 : f32 to vector<1x512xf32>
    %78 = arith.divf %76, %77 : vector<1x512xf32>
    %79 = arith.mulf %74, %74 : vector<32x512xf32>
    %cst_22 = arith.constant dense<0.000000e+00> : vector<512xf32>
    %80 = vector.multi_reduction <add>, %79, %cst_22 [0] : vector<32x512xf32> to vector<512xf32>
    %81 = vector.shape_cast %80 : vector<512xf32> to vector<1x512xf32>
    %cst_23 = arith.constant 3.200000e+01 : f32
    %82 = vector.broadcast %cst_23 : f32 to vector<1x512xf32>
    %83 = arith.divf %81, %82 : vector<1x512xf32>
    %84 = arith.mulf %78, %78 : vector<1x512xf32>
    %85 = arith.subf %83, %84 : vector<1x512xf32>
    %cst_24 = arith.constant 0.000000e+00 : f32
    %86 = vector.broadcast %cst_24 : f32 to vector<1x512xf32>
    %87 = arith.maximumf %85, %86 : vector<1x512xf32>
    %88 = vector.broadcast %78 : vector<1x512xf32> to vector<32x512xf32>
    %89 = arith.subf %74, %88 : vector<32x512xf32>
    %cst_25 = arith.constant 9.99999974E-6 : f32
    %90 = vector.broadcast %cst_25 : f32 to vector<1x512xf32>
    %91 = arith.addf %87, %90 : vector<1x512xf32>
    %92 = math.rsqrt %91 : vector<1x512xf32>
    %93 = vector.broadcast %92 : vector<1x512xf32> to vector<32x512xf32>
    %94 = arith.mulf %89, %93 : vector<32x512xf32>
    %95 = vector.broadcast %68 : vector<32x1xf32> to vector<32x512xf32>
    %96 = arith.mulf %94, %95 : vector<32x512xf32>
    %97 = vector.broadcast %69 : vector<32x1xf32> to vector<32x512xf32>
    %98 = arith.addf %96, %97 : vector<32x512xf32>
    %c0_26 = arith.constant 0 : index
    %c0_27 = arith.constant 0 : index
    %99 = vector.load %arg4[%c0_26, %c0_27] : memref<1x32xf32, #tpu.memory_space<vmem>>, vector<1x32xf32>
    %cst_28 = arith.constant dense<0.000000e+00> : vector<1x512xf32>
    %100 = tpu.matmul %99, %98, %cst_28 {dimension_numbers = #tpu.dot_dimension_numbers<[1], [0], [0], [1], [0, 0, 1, 1], [], []>} : vector<1x32xf32>, vector<32x512xf32>, vector<1x512xf32> -> vector<1x512xf32>
    %c0_29 = arith.constant 0 : index
    %c0_30 = arith.constant 0 : index
    %101 = vector.load %arg6[%c0_29, %c0_30] : memref<1x1xf32, #tpu.memory_space<vmem>>, vector<1x1xf32>
    %102 = vector.broadcast %101 : vector<1x1xf32> to vector<1x512xf32>
    %103 = arith.addf %100, %102 : vector<1x512xf32>
    %cst_31 = arith.constant 0.000000e+00 : f32
    %104 = vector.broadcast %cst_31 : f32 to vector<1x512xf32>
    %105 = arith.maximumf %103, %104 : vector<1x512xf32>
    %c0_32 = arith.constant 0 : index
    %c0_33 = arith.constant 0 : index
    %106 = vector.load %arg7[%c0_32, %c0_33] : memref<1x512xf32, #tpu.memory_space<vmem>>, vector<1x512xf32>
    tpu.vector_store %arg7[%c0_32, %c0_33], %105 {strides = array<i32>} : memref<1x512xf32, #tpu.memory_space<vmem>>, vector<1x512xf32>,
    return
  }
  func.func @transform_0(%arg0: i32) -> (i32, i32) {
    %c0_i32 = arith.constant 0 : i32
    %c0_i32_0 = arith.constant 0 : i32
    return %c0_i32, %arg0 : i32, i32
  }
  func.func @transform_1(%arg0: i32) -> (i32, i32) {
    %c0_i32 = arith.constant 0 : i32
    %c0_i32_0 = arith.constant 0 : i32
    %c0_i32_1 = arith.constant 0 : i32
    return %c0_i32, %c0_i32_0 : i32, i32
  }
  func.func @transform_2(%arg0: i32) -> (i32, i32) {
    %c0_i32 = arith.constant 0 : i32
    %c0_i32_0 = arith.constant 0 : i32
    %c0_i32_1 = arith.constant 0 : i32
    return %c0_i32, %c0_i32_0 : i32, i32
  }
  func.func @transform_3(%arg0: i32) -> (i32, i32) {
    %c0_i32 = arith.constant 0 : i32
    %c0_i32_0 = arith.constant 0 : i32
    %c0_i32_1 = arith.constant 0 : i32
    return %c0_i32, %c0_i32_0 : i32, i32
  }
  func.func @transform_4(%arg0: i32) -> (i32, i32, i32) {
    %c0_i32 = arith.constant 0 : i32
    %c0_i32_0 = arith.constant 0 : i32
    %c0_i32_1 = arith.constant 0 : i32
    %c0_i32_2 = arith.constant 0 : i32
    return %c0_i32, %c0_i32_0, %c0_i32_1 : i32, i32, i32
  }
  func.func @transform_5(%arg0: i32) -> (i32, i32) {
    %c0_i32 = arith.constant 0 : i32
    %c0_i32_0 = arith.constant 0 : i32
    %c0_i32_1 = arith.constant 0 : i32
    return %c0_i32, %c0_i32_0 : i32, i32
  }
  func.func @transform_6(%arg0: i32) -> (i32, i32) {
    %c0_i32 = arith.constant 0 : i32
    %c0_i32_0 = arith.constant 0 : i32
    return %c0_i32, %arg0 : i32, i32
  }
}

</mosaic_0001>

<llo_original>
// kernel: tpu_custom_call.1
$region0: #{tpu_custom_call.1}
  #allocation0 [shape = 'u32[]', space=smem, size = 0x4, offset = 0x4, fixed_abs, tag = 'smem constant byte address 0x4 - core index']
  #allocation1 [shape = 'u32[144,128]{1,0:T(1,128)}', space=vmem, size = 0x12000, scoped, tag = 'internal scratch']
  #allocation2 [shape = 'f32[1,1]{1,0:T(1,128)S(1)}', space=vmem, size = 0x200, scoped, tag = 'scoped memory for tpu_custom_call.1']
  %s0 = inlined_call_operand.vmem [shape: f32[4,2048], index: 0, kind: input, shape index: {}]
  %s1 = inlined_call_operand.vmem [shape: f32[32,4], index: 1, kind: input, shape index: {}]
  %s2 = inlined_call_operand.vmem [shape: f32[32,32], index: 2, kind: input, shape index: {}]
  %s3 = inlined_call_operand.vmem [shape: f32[1,32], index: 3, kind: input, shape index: {}]
  %s4 = inlined_call_operand.vmem [shape: f32[2,32,3], index: 4, kind: input, shape index: {}]
  %s5 = inlined_call_operand.<no memory space> [shape: f32[1,1], index: 5, kind: input, shape index: {}]
  %s6 = inlined_call_operand.hbm [shape: f32[1,2048], index: 6, kind: output, shape index: {}]
  %s7 = sld [smem:[#allocation0]]
  $region57: #{tpu_custom_call.1} parent=0
    _
  %s9 = ssub.s32 1, %s7
  %s10 = scalar_select 0, %s9, %s7
  %v11 = vstv %s5
  %12 = vst [vmem:[#allocation2] sm:$0x1] %v11
  $region1: #{tpu_custom_call.1} parent=0
    #allocation3 [shape = 'u8[4096]{0}', space=vmem, size = 0x1000, scoped, tag = 'output window, operand 0']
    #allocation4 [shape = 's32[2]{0}', space=sflag, size = 0x8, scoped, tag = 'scoped memory for tpu_custom_call.1']
    %13 = vsyncpa [#allocation4], 0
    %s14 = scalar_lea.sflag [#allocation4], 1
    %15 = vsyncpa %s14, 0
    loop: start=0, step=1, limit=6
    $region2: #{tpu_custom_call.1} parent=1 // loop_pre_header
      _
    $region3: #{tpu_custom_call.1} parent=1 // loop_header
      %s17 = sphi 0, %s21
      %p18 = scmp.ge.s32.totalorder %s17, 6
      %s27 = sphi 0, %s29
      %s30 = sphi 0, %s27
      %s31 = sphi 0, %s30
      %s47 = sphi 0, %s31
      %s51 = sphi 0, %s51
      %s53 = sphi 0, %s51
      %s54 = sphi 0, %s53
      %s68 = sphi 0, %s54
      %s72 = sphi 0, %s72
      %s74 = sphi 0, %s72
      %s75 = sphi 0, %s74
      %s89 = sphi 0, %s75
      %s93 = sphi 0, %s93
      %s95 = sphi 0, %s93
      %s96 = sphi 0, %s95
      %s110 = sphi 0, %s96
      %s114 = sphi 0, %s114
      %s116 = sphi 0, %s114
      %s117 = sphi 0, %s116
      %s131 = sphi 0, %s117
      %s135 = sphi 0, %s135
      %s137 = sphi 0, %s135
      %s138 = sphi 0, %s137
      %s152 = sphi 0, %s138
      %s158 = sphi 0, %s160
      %s161 = sphi 0, %s158
      %s162 = sphi 0, %s161
      %s178 = sphi 0, %s162
    $region4: #{tpu_custom_call.1} parent=1 // loop_header_branch
      %20 = sbr.rel (%p18) target = $region8
    $region5: #{tpu_custom_call.1} parent=1 // loop_body
      %s22 = ssub.s32 %s17, 1
      %s23 = ssub.s32 %s17, 2
      %s24 = sadd.s32 %s17, 1
      %s25 = ssub.s32 %s17, %s24
      %p26 = scmp.eq.s32.totalorder %s25, 0
      %s28 = sadd.s32 %s27, 1
      %s29 = scalar_select %p26, %s27, %s28
      %p32 = pneg %p26
      %p33 = scmp.eq.s32.totalorder %s17, 3
      %p34 = por %p32, %p33
      %p35 = scmp.ne.s32.totalorder %s27, %s30
      %p36 = scmp.eq.s32.totalorder %s17, 0
      %p37 = por %p35, %p36
      %p38 = scmp.ne.s32.totalorder %s27, %s30
      %p39 = scmp.eq.s32.totalorder %s22, 3
      %p40 = por %p38, %p39
      %p41 = scmp.ne.s32.totalorder %s30, %s31
      %p42 = scmp.eq.s32.totalorder %s22, 0
      %p43 = por %p41, %p42
      %p44 = scmp.ne.s32.totalorder %s30, %s31
      %p45 = scmp.eq.s32.totalorder %s23, 3
      %p46 = por %p44, %p45
      %p48 = scmp.ne.s32.totalorder %s31, %s47
      %p49 = scmp.eq.s32.totalorder %s23, 0
      %p50 = por %p48, %p49
      %s52 = sadd.s32 %s51, 1
      %p55 = scmp.eq.s32.totalorder %s17, 3
      %p56 = scmp.ne.s32.totalorder %s51, %s53
      %p57 = scmp.eq.s32.totalorder %s17, 0
      %p58 = por %p56, %p57
      %p59 = scmp.ne.s32.totalorder %s51, %s53
      %p60 = scmp.eq.s32.totalorder %s22, 3
      %p61 = por %p59, %p60
      %p62 = scmp.ne.s32.totalorder %s53, %s54
      %p63 = scmp.eq.s32.totalorder %s22, 0
      %p64 = por %p62, %p63
      %p65 = scmp.ne.s32.totalorder %s53, %s54
      %p66 = scmp.eq.s32.totalorder %s23, 3
      %p67 = por %p65, %p66
      %p69 = scmp.ne.s32.totalorder %s54, %s68
      %p70 = scmp.eq.s32.totalorder %s23, 0
      %p71 = por %p69, %p70
      %s73 = sadd.s32 %s72, 1
      %p76 = scmp.eq.s32.totalorder %s17, 3
      %p77 = scmp.ne.s32.totalorder %s72, %s74
      %p78 = scmp.eq.s32.totalorder %s17, 0
      %p79 = por %p77, %p78
      %p80 = scmp.ne.s32.totalorder %s72, %s74
      %p81 = scmp.eq.s32.totalorder %s22, 3
      %p82 = por %p80, %p81
      %p83 = scmp.ne.s32.totalorder %s74, %s75
      %p84 = scmp.eq.s32.totalorder %s22, 0
      %p85 = por %p83, %p84
      %p86 = scmp.ne.s32.totalorder %s74, %s75
      %p87 = scmp.eq.s32.totalorder %s23, 3
      %p88 = por %p86, %p87
      %p90 = scmp.ne.s32.totalorder %s75, %s89
      %p91 = scmp.eq.s32.totalorder %s23, 0
      %p92 = por %p90, %p91
      %s94 = sadd.s32 %s93, 1
      %p97 = scmp.eq.s32.totalorder %s17, 3
      %p98 = scmp.ne.s32.totalorder %s93, %s95
      %p99 = scmp.eq.s32.totalorder %s17, 0
      %p100 = por %p98, %p99
      %p101 = scmp.ne.s32.totalorder %s93, %s95
      %p102 = scmp.eq.s32.totalorder %s22, 3
      %p103 = por %p101, %p102
      %p104 = scmp.ne.s32.totalorder %s95, %s96
      %p105 = scmp.eq.s32.totalorder %s22, 0
      %p106 = por %p104, %p105
      %p107 = scmp.ne.s32.totalorder %s95, %s96
      %p108 = scmp.eq.s32.totalorder %s23, 3
      %p109 = por %p107, %p108
      %p111 = scmp.ne.s32.totalorder %s96, %s110
      %p112 = scmp.eq.s32.totalorder %s23, 0
      %p113 = por %p111, %p112
      %s115 = sadd.s32 %s114, 1
      %p118 = scmp.eq.s32.totalorder %s17, 3
      %p119 = scmp.ne.s32.totalorder %s114, %s116
      %p120 = scmp.eq.s32.totalorder %s17, 0
      %p121 = por %p119, %p120
      %p122 = scmp.ne.s32.totalorder %s114, %s116
      %p123 = scmp.eq.s32.totalorder %s22, 3
      %p124 = por %p122, %p123
      %p125 = scmp.ne.s32.totalorder %s116, %s117
      %p126 = scmp.eq.s32.totalorder %s22, 0
      %p127 = por %p125, %p126
      %p128 = scmp.ne.s32.totalorder %s116, %s117
      %p129 = scmp.eq.s32.totalorder %s23, 3
      %p130 = por %p128, %p129
      %p132 = scmp.ne.s32.totalorder %s117, %s131
      %p133 = scmp.eq.s32.totalorder %s23, 0
      %p134 = por %p132, %p133
      %s136 = sadd.s32 %s135, 1
      %p139 = scmp.eq.s32.totalorder %s17, 3
      %p140 = scmp.ne.s32.totalorder %s135, %s137
      %p141 = scmp.eq.s32.totalorder %s17, 0
      %p142 = por %p140, %p141
      %p143 = scmp.ne.s32.totalorder %s135, %s137
      %p144 = scmp.eq.s32.totalorder %s22, 3
      %p145 = por %p143, %p144
      %p146 = scmp.ne.s32.totalorder %s137, %s138
      %p147 = scmp.eq.s32.totalorder %s22, 0
      %p148 = por %p146, %p147
      %p149 = scmp.ne.s32.totalorder %s137, %s138
      %p150 = scmp.eq.s32.totalorder %s23, 3
      %p151 = por %p149, %p150
      %p153 = scmp.ne.s32.totalorder %s138, %s152
      %p154 = scmp.eq.s32.totalorder %s23, 0
      %p155 = por %p153, %p154
      %s156 = ssub.s32 %s17, %s24
      %p157 = scmp.eq.s32.totalorder %s156, 0
      %s159 = sadd.s32 %s158, 1
      %s160 = scalar_select %p157, %s158, %s159
      %p163 = pneg %p157
      %p164 = scmp.eq.s32.totalorder %s17, 3
      %p165 = por %p163, %p164
      %p166 = scmp.ne.s32.totalorder %s158, %s161
      %p167 = scmp.eq.s32.totalorder %s17, 0
      %p168 = por %p166, %p167
      %p169 = scmp.ne.s32.totalorder %s158, %s161
      %p170 = scmp.eq.s32.totalorder %s22, 3
      %p171 = por %p169, %p170
      %p172 = scmp.ne.s32.totalorder %s161, %s162
      %p173 = scmp.eq.s32.totalorder %s22, 0
      %p174 = por %p172, %p173
      %p175 = scmp.ne.s32.totalorder %s161, %s162
      %p176 = scmp.eq.s32.totalorder %s23, 3
      %p177 = por %p175, %p176
      %p179 = scmp.ne.s32.totalorder %s162, %s178
      %p180 = scmp.eq.s32.totalorder %s23, 0
      %p181 = por %p179, %p180
      %p182 = scmp.le.s32.totalorder 1, %s17
      %p183 = scmp.lt.s32.totalorder %s17, 5
      %p184 = pnand %p182, %p183
      %p185 = pneg %p184
      // Predicated region
      $region9: #{tpu_custom_call.1} parent=5 // pred_check
        _
      $region10: #{tpu_custom_call.1} parent=5 // pred_check_branch
        %187 = sbr.rel (%p184) target = $region12
      $region11: #{tpu_custom_call.1} parent=5 // pred_region
        %s188 = ssub.s32 %s17, 1
        // Predicated region
        $region13: #{tpu_custom_call.1} parent=11 // pred_check
          %p189 = pneg %p64
        $region14: #{tpu_custom_call.1} parent=11 // pred_check_branch
          %191 = sbr.rel (%p189) target = $region16
        $region15: #{tpu_custom_call.1} parent=11 // pred_region
          _
        $region16: #{tpu_custom_call.1} parent=11 // pred_fallthru
          _
        // Predicated region
        $region17: #{tpu_custom_call.1} parent=11 // pred_check
          %p192 = pneg %p85
        $region18: #{tpu_custom_call.1} parent=11 // pred_check_branch
          %194 = sbr.rel (%p192) target = $region20
        $region19: #{tpu_custom_call.1} parent=11 // pred_region
          _
        $region20: #{tpu_custom_call.1} parent=11 // pred_fallthru
          _
        // Predicated region
        $region21: #{tpu_custom_call.1} parent=11 // pred_check
          %p195 = pneg %p106
        $region22: #{tpu_custom_call.1} parent=11 // pred_check_branch
          %197 = sbr.rel (%p195) target = $region24
        $region23: #{tpu_custom_call.1} parent=11 // pred_region
          _
        $region24: #{tpu_custom_call.1} parent=11 // pred_fallthru
          _
        // Predicated region
        $region25: #{tpu_custom_call.1} parent=11 // pred_check
          %p198 = pneg %p127
        $region26: #{tpu_custom_call.1} parent=11 // pred_check_branch
          %200 = sbr.rel (%p198) target = $region28
        $region27: #{tpu_custom_call.1} parent=11 // pred_region
          _
        $region28: #{tpu_custom_call.1} parent=11 // pred_fallthru
          _
        // Predicated region
        $region29: #{tpu_custom_call.1} parent=11 // pred_check
          %p201 = pneg %p148
        $region30: #{tpu_custom_call.1} parent=11 // pred_check_branch
          %203 = sbr.rel (%p201) target = $region32
        $region31: #{tpu_custom_call.1} parent=11 // pred_region
          _
        $region32: #{tpu_custom_call.1} parent=11 // pred_fallthru
          _
      $region12: #{tpu_custom_call.1} parent=5 // pred_fallthru
        _
      %p204 = scmp.lt.s32.totalorder %s17, 4
      // Predicated region
      $region33: #{tpu_custom_call.1} parent=5 // pred_check
        %p205 = pneg %p204
      $region34: #{tpu_custom_call.1} parent=5 // pred_check_branch
        %207 = sbr.rel (%p205) target = $region36
      $region35: #{tpu_custom_call.1} parent=5 // pred_region
        // Predicated region
        $region37: #{tpu_custom_call.1} parent=35 // pred_check
          %p208 = pneg %p37
        $region38: #{tpu_custom_call.1} parent=35 // pred_check_branch
          %210 = sbr.rel (%p208) target = $region40
        $region39: #{tpu_custom_call.1} parent=35 // pred_region
          %s211 = smul.u32 4, %s17
          %p212 = scmp.lt.s32.totalorder %s211, 15
          %s213 = scalar_select %p212, %s211, 15
          %s214 = smul.addr %s213, 4
          %s215 = scalar_lea.vmem %s0, %s214
          %s216 = smul.u32 4, %s17
        $region40: #{tpu_custom_call.1} parent=35 // pred_fallthru
          _
      $region36: #{tpu_custom_call.1} parent=5 // pred_fallthru
        _
      %p217 = scmp.le.s32.totalorder 1, %s17
      %p218 = scmp.lt.s32.totalorder %s17, 5
      %p219 = pnand %p217, %p218
      %p220 = pneg %p219
      // Predicated region
      $region41: #{tpu_custom_call.1} parent=5 // pred_check
        _
      $region42: #{tpu_custom_call.1} parent=5 // pred_check_branch
        %222 = sbr.rel (%p219) target = $region44
      $region43: #{tpu_custom_call.1} parent=5 // pred_region
        %s223 = ssub.s32 %s17, 1
        %s224 = smul.u32 4, %s22
        %p225 = scmp.lt.s32.totalorder %s224, 15
        %s226 = scalar_select %p225, %s224, 15
        %s227 = smul.addr %s226, 4
        %s228 = scalar_lea.vmem %s0, %s227
        %p229 = pneg %p43
        %p230 = pneg %p40
        %p231 = pneg %p64
        %p232 = pneg %p61
        %p233 = pneg %p85
        %p234 = pneg %p82
        %p235 = pneg %p106
        %p236 = pneg %p103
        %p237 = pneg %p127
        %p238 = pneg %p124
        %p239 = pneg %p148
        %p240 = pneg %p145
        %p241 = pneg %p174
        %p242 = pneg %p171
        %s243 = sand.u32 %s161, 1
        %s244 = scalar_lea.sflag [#allocation4], %s243
        %s245 = sand.u32 %s161, 1
        %s246 = smul.addr %s245, 4
        %s247 = scalar_lea.vmem [#allocation3], %s246
        %s248 = smul.u32 4, %s22
        %p249 = scmp.lt.s32.totalorder %s248, 15
        %s250 = scalar_select %p249, %s248, 15
        %s251 = smul.addr %s250, 4
        %s252 = scalar_lea.vmem %s0, %s251
        %s253 = smul.u32 4, %s22
        %s254 = smul.u32 4, %s22
        %v255 = vld [vmem:[%s252] sm:$0xff]
        %v256 = vld [vmem:[%s252 + $0x8] sm:$0xff]
        %v257 = vld [vmem:[%s1] sm:$0xff]
        %v258 = vld [vmem:[%s1 + $0x8] sm:$0xff]
        %v259 = vld [vmem:[%s1 + $0x10] sm:$0xff]
        %v260 = vld [vmem:[%s1 + $0x18] sm:$0xff]
        %v261 = vld [vmem:[%s4] sm:$0xff]
        %v262 = vld [vmem:[%s4 + $0x8] sm:$0xff]
        %v263 = vld [vmem:[%s4 + $0x10] sm:$0xff]
        %v264 = vld [vmem:[%s4 + $0x18] sm:$0xff]
        %266 = vset.pattern.permute.xlu0 0
        %267 = vperm.xlu0 %266, %v257
        %v268 = vpop.permute.xlu0 %267
        %271 = vset.pattern.permute.xlu0 0
        %272 = vperm.xlu0 %271, %v258
        %v273 = vpop.permute.xlu0 %272
        %276 = vset.pattern.permute.xlu0 0
        %277 = vperm.xlu0 %276, %v259
        %v278 = vpop.permute.xlu0 %277
        %281 = vset.pattern.permute.xlu0 0
        %282 = vperm.xlu0 %281, %v260
        %v283 = vpop.permute.xlu0 %282
        %v287 = vlaneseq
        %v288 = vshrl.u32 %v287, 7
        %v289 = vsub.s32 0, %v288
        %v290 = vrot.slane %v255, %v289
        %v291 = vlaneseq
        %v292 = vshrl.u32 %v291, 7
        %v293 = vsub.s32 4, %v292
        %v294 = vrot.slane %v255, %v293
        %v295 = vlaneseq
        %v296 = vshrl.u32 %v295, 7
        %v297 = vsub.s32 0, %v296
        %v298 = vrot.slane %v256, %v297
        %v299 = vlaneseq
        %v300 = vshrl.u32 %v299, 7
        %v301 = vsub.s32 4, %v300
        %v302 = vrot.slane %v256, %v301
        %v307 = vlaneseq
        %v308 = vshrl.u32 %v307, 7
        %v309 = vsub.s32 0, %v308
        %v310 = vrot.slane %v290, %v309
        %v311 = vlaneseq
        %v312 = vshrl.u32 %v311, 7
        %v313 = vsub.s32 0, %v312
        %v314 = vrot.slane %v294, %v313
        %v315 = vlaneseq
        %v316 = vshrl.u32 %v315, 7
        %v317 = vsub.s32 0, %v316
        %v318 = vrot.slane %v298, %v317
        %v319 = vlaneseq
        %v320 = vshrl.u32 %v319, 7
        %v321 = vsub.s32 0, %v320
        %v322 = vrot.slane %v302, %v321
        %v323 = vmul.f32 %v268, %v310
        %v324 = vmul.f32 %v268, %v314
        %v325 = vmul.f32 %v268, %v318
        %v326 = vmul.f32 %v268, %v322
        %v327 = vmul.f32 %v273, %v310
        %v328 = vmul.f32 %v273, %v314
        %v329 = vmul.f32 %v273, %v318
        %v330 = vmul.f32 %v273, %v322
        %v331 = vmul.f32 %v278, %v310
        %v332 = vmul.f32 %v278, %v314
        %v333 = vmul.f32 %v278, %v318
        %v334 = vmul.f32 %v278, %v322
        %v335 = vmul.f32 %v283, %v310
        %v336 = vmul.f32 %v283, %v314
        %v337 = vmul.f32 %v283, %v318
        %v338 = vmul.f32 %v283, %v322
        %339 = vset.pattern.permute.xlu0 1
        %340 = vperm.xlu0 %339, %v257
        %v341 = vpop.permute.xlu0 %340
        %343 = vset.pattern.permute.xlu0 1
        %344 = vperm.xlu0 %343, %v258
        %v345 = vpop.permute.xlu0 %344
        %347 = vset.pattern.permute.xlu0 1
        %348 = vperm.xlu0 %347, %v259
        %v349 = vpop.permute.xlu0 %348
        %351 = vset.pattern.permute.xlu0 1
        %352 = vperm.xlu0 %351, %v260
        %v353 = vpop.permute.xlu0 %352
        %v355 = vlaneseq
        %v356 = vshrl.u32 %v355, 7
        %v357 = vsub.s32 1, %v356
        %v358 = vrot.slane %v255, %v357
        %v359 = vlaneseq
        %v360 = vshrl.u32 %v359, 7
        %v361 = vsub.s32 5, %v360
        %v362 = vrot.slane %v255, %v361
        %v363 = vlaneseq
        %v364 = vshrl.u32 %v363, 7
        %v365 = vsub.s32 1, %v364
        %v366 = vrot.slane %v256, %v365
        %v367 = vlaneseq
        %v368 = vshrl.u32 %v367, 7
        %v369 = vsub.s32 5, %v368
        %v370 = vrot.slane %v256, %v369
        %v375 = vlaneseq
        %v376 = vshrl.u32 %v375, 7
        %v377 = vsub.s32 1, %v376
        %v378 = vrot.slane %v358, %v377
        %v379 = vlaneseq
        %v380 = vshrl.u32 %v379, 7
        %v381 = vsub.s32 1, %v380
        %v382 = vrot.slane %v362, %v381
        %v383 = vlaneseq
        %v384 = vshrl.u32 %v383, 7
        %v385 = vsub.s32 1, %v384
        %v386 = vrot.slane %v366, %v385
        %v387 = vlaneseq
        %v388 = vshrl.u32 %v387, 7
        %v389 = vsub.s32 1, %v388
        %v390 = vrot.slane %v370, %v389
        %v391 = vmul.f32 %v341, %v378
        %v392 = vmul.f32 %v341, %v382
        %v393 = vmul.f32 %v341, %v386
        %v394 = vmul.f32 %v341, %v390
        %v395 = vmul.f32 %v345, %v378
        %v396 = vmul.f32 %v345, %v382
        %v397 = vmul.f32 %v345, %v386
        %v398 = vmul.f32 %v345, %v390
        %v399 = vmul.f32 %v349, %v378
        %v400 = vmul.f32 %v349, %v382
        %v401 = vmul.f32 %v349, %v386
        %v402 = vmul.f32 %v349, %v390
        %v403 = vmul.f32 %v353, %v378
        %v404 = vmul.f32 %v353, %v382
        %v405 = vmul.f32 %v353, %v386
        %v406 = vmul.f32 %v353, %v390
        %v407 = vadd.f32 %v323, %v391
        %v408 = vadd.f32 %v324, %v392
        %v409 = vadd.f32 %v325, %v393
        %v410 = vadd.f32 %v326, %v394
        %v411 = vadd.f32 %v327, %v395
        %v412 = vadd.f32 %v328, %v396
        %v413 = vadd.f32 %v329, %v397
        %v414 = vadd.f32 %v330, %v398
        %v415 = vadd.f32 %v331, %v399
        %v416 = vadd.f32 %v332, %v400
        %v417 = vadd.f32 %v333, %v401
        %v418 = vadd.f32 %v334, %v402
        %v419 = vadd.f32 %v335, %v403
        %v420 = vadd.f32 %v336, %v404
        %v421 = vadd.f32 %v337, %v405
        %v422 = vadd.f32 %v338, %v406
        %423 = vset.pattern.permute.xlu0 2
        %424 = vperm.xlu0 %423, %v257
        %v425 = vpop.permute.xlu0 %424
        %427 = vset.pattern.permute.xlu0 2
        %428 = vperm.xlu0 %427, %v258
        %v429 = vpop.permute.xlu0 %428
        %431 = vset.pattern.permute.xlu0 2
        %432 = vperm.xlu0 %431, %v259
        %v433 = vpop.permute.xlu0 %432
        %435 = vset.pattern.permute.xlu0 2
        %436 = vperm.xlu0 %435, %v260
        %v437 = vpop.permute.xlu0 %436
        %v439 = vlaneseq
        %v440 = vshrl.u32 %v439, 7
        %v441 = vsub.s32 2, %v440
        %v442 = vrot.slane %v255, %v441
        %v443 = vlaneseq
        %v444 = vshrl.u32 %v443, 7
        %v445 = vsub.s32 6, %v444
        %v446 = vrot.slane %v255, %v445
        %v447 = vlaneseq
        %v448 = vshrl.u32 %v447, 7
        %v449 = vsub.s32 2, %v448
        %v450 = vrot.slane %v256, %v449
        %v451 = vlaneseq
        %v452 = vshrl.u32 %v451, 7
        %v453 = vsub.s32 6, %v452
        %v454 = vrot.slane %v256, %v453
        %v459 = vlaneseq
        %v460 = vshrl.u32 %v459, 7
        %v461 = vsub.s32 2, %v460
        %v462 = vrot.slane %v442, %v461
        %v463 = vlaneseq
        %v464 = vshrl.u32 %v463, 7
        %v465 = vsub.s32 2, %v464
        %v466 = vrot.slane %v446, %v465
        %v467 = vlaneseq
        %v468 = vshrl.u32 %v467, 7
        %v469 = vsub.s32 2, %v468
        %v470 = vrot.slane %v450, %v469
        %v471 = vlaneseq
        %v472 = vshrl.u32 %v471, 7
        %v473 = vsub.s32 2, %v472
        %v474 = vrot.slane %v454, %v473
        %v475 = vmul.f32 %v425, %v462
        %v476 = vmul.f32 %v425, %v466
        %v477 = vmul.f32 %v425, %v470
        %v478 = vmul.f32 %v425, %v474
        %v479 = vmul.f32 %v429, %v462
        %v480 = vmul.f32 %v429, %v466
        %v481 = vmul.f32 %v429, %v470
        %v482 = vmul.f32 %v429, %v474
        %v483 = vmul.f32 %v433, %v462
        %v484 = vmul.f32 %v433, %v466
        %v485 = vmul.f32 %v433, %v470
        %v486 = vmul.f32 %v433, %v474
        %v487 = vmul.f32 %v437, %v462
        %v488 = vmul.f32 %v437, %v466
        %v489 = vmul.f32 %v437, %v470
        %v490 = vmul.f32 %v437, %v474
        %v491 = vadd.f32 %v407, %v475
        %v492 = vadd.f32 %v408, %v476
        %v493 = vadd.f32 %v409, %v477
        %v494 = vadd.f32 %v410, %v478
        %v495 = vadd.f32 %v411, %v479
        %v496 = vadd.f32 %v412, %v480
        %v497 = vadd.f32 %v413, %v481
        %v498 = vadd.f32 %v414, %v482
        %v499 = vadd.f32 %v415, %v483
        %v500 = vadd.f32 %v416, %v484
        %v501 = vadd.f32 %v417, %v485
        %v502 = vadd.f32 %v418, %v486
        %v503 = vadd.f32 %v419, %v487
        %v504 = vadd.f32 %v420, %v488
        %v505 = vadd.f32 %v421, %v489
        %v506 = vadd.f32 %v422, %v490
        %507 = vset.pattern.permute.xlu0 3
        %508 = vperm.xlu0 %507, %v257
        %v509 = vpop.permute.xlu0 %508
        %511 = vset.pattern.permute.xlu0 3
        %512 = vperm.xlu0 %511, %v258
        %v513 = vpop.permute.xlu0 %512
        %515 = vset.pattern.permute.xlu0 3
        %516 = vperm.xlu0 %515, %v259
        %v517 = vpop.permute.xlu0 %516
        %519 = vset.pattern.permute.xlu0 3
        %520 = vperm.xlu0 %519, %v260
        %v521 = vpop.permute.xlu0 %520
        %v523 = vlaneseq
        %v524 = vshrl.u32 %v523, 7
        %v525 = vsub.s32 3, %v524
        %v526 = vrot.slane %v255, %v525
        %v527 = vlaneseq
        %v528 = vshrl.u32 %v527, 7
        %v529 = vsub.s32 7, %v528
        %v530 = vrot.slane %v255, %v529
        %v531 = vlaneseq
        %v532 = vshrl.u32 %v531, 7
        %v533 = vsub.s32 3, %v532
        %v534 = vrot.slane %v256, %v533
        %v535 = vlaneseq
        %v536 = vshrl.u32 %v535, 7
        %v537 = vsub.s32 7, %v536
        %v538 = vrot.slane %v256, %v537
        %v543 = vlaneseq
        %v544 = vshrl.u32 %v543, 7
        %v545 = vsub.s32 3, %v544
        %v546 = vrot.slane %v526, %v545
        %v547 = vlaneseq
        %v548 = vshrl.u32 %v547, 7
        %v549 = vsub.s32 3, %v548
        %v550 = vrot.slane %v530, %v549
        %v551 = vlaneseq
        %v552 = vshrl.u32 %v551, 7
        %v553 = vsub.s32 3, %v552
        %v554 = vrot.slane %v534, %v553
        %v555 = vlaneseq
        %v556 = vshrl.u32 %v555, 7
        %v557 = vsub.s32 3, %v556
        %v558 = vrot.slane %v538, %v557
        %v559 = vmul.f32 %v509, %v546
        %v560 = vmul.f32 %v509, %v550
        %v561 = vmul.f32 %v509, %v554
        %v562 = vmul.f32 %v509, %v558
        %v563 = vmul.f32 %v513, %v546
        %v564 = vmul.f32 %v513, %v550
        %v565 = vmul.f32 %v513, %v554
        %v566 = vmul.f32 %v513, %v558
        %v567 = vmul.f32 %v517, %v546
        %v568 = vmul.f32 %v517, %v550
        %v569 = vmul.f32 %v517, %v554
        %v570 = vmul.f32 %v517, %v558
        %v571 = vmul.f32 %v521, %v546
        %v572 = vmul.f32 %v521, %v550
        %v573 = vmul.f32 %v521, %v554
        %v574 = vmul.f32 %v521, %v558
        %v575 = vadd.f32 %v491, %v559
        %v576 = vadd.f32 %v492, %v560
        %v577 = vadd.f32 %v493, %v561
        %v578 = vadd.f32 %v494, %v562
        %v579 = vadd.f32 %v495, %v563
        %v580 = vadd.f32 %v496, %v564
        %v581 = vadd.f32 %v497, %v565
        %v582 = vadd.f32 %v498, %v566
        %v583 = vadd.f32 %v499, %v567
        %v584 = vadd.f32 %v500, %v568
        %v585 = vadd.f32 %v501, %v569
        %v586 = vadd.f32 %v502, %v570
        %v587 = vadd.f32 %v503, %v571
        %v588 = vadd.f32 %v504, %v572
        %v589 = vadd.f32 %v505, %v573
        %v590 = vadd.f32 %v506, %v574
        %592 = vset.pattern.permute.xlu0 0
        %593 = vperm.xlu0 %592, %v261
        %v594 = vpop.permute.xlu0 %593
        %597 = vset.pattern.permute.xlu0 0
        %598 = vperm.xlu0 %597, %v262
        %v599 = vpop.permute.xlu0 %598
        %602 = vset.pattern.permute.xlu0 0
        %603 = vperm.xlu0 %602, %v263
        %v604 = vpop.permute.xlu0 %603
        %607 = vset.pattern.permute.xlu0 0
        %608 = vperm.xlu0 %607, %v264
        %v609 = vpop.permute.xlu0 %608
        %v611 = vadd.f32 %v575, %v594
        %v612 = vadd.f32 %v576, %v594
        %v613 = vadd.f32 %v577, %v594
        %v614 = vadd.f32 %v578, %v594
        %v615 = vadd.f32 %v579, %v599
        %v616 = vadd.f32 %v580, %v599
        %v617 = vadd.f32 %v581, %v599
        %v618 = vadd.f32 %v582, %v599
        %v619 = vadd.f32 %v583, %v604
        %v620 = vadd.f32 %v584, %v604
        %v621 = vadd.f32 %v585, %v604
        %v622 = vadd.f32 %v586, %v604
        %v623 = vadd.f32 %v587, %v609
        %v624 = vadd.f32 %v588, %v609
        %v625 = vadd.f32 %v589, %v609
        %v626 = vadd.f32 %v590, %v609
        %vm627 = vcmp.gt.f32.partialorder %v611, 0.0
        %vm628 = vcmp.gt.f32.partialorder %v612, 0.0
        %vm629 = vcmp.gt.f32.partialorder %v613, 0.0
        %vm630 = vcmp.gt.f32.partialorder %v614, 0.0
        %vm631 = vcmp.gt.f32.partialorder %v615, 0.0
        %vm632 = vcmp.gt.f32.partialorder %v616, 0.0
        %vm633 = vcmp.gt.f32.partialorder %v617, 0.0
        %vm634 = vcmp.gt.f32.partialorder %v618, 0.0
        %vm635 = vcmp.gt.f32.partialorder %v619, 0.0
        %vm636 = vcmp.gt.f32.partialorder %v620, 0.0
        %vm637 = vcmp.gt.f32.partialorder %v621, 0.0
        %vm638 = vcmp.gt.f32.partialorder %v622, 0.0
        %vm639 = vcmp.gt.f32.partialorder %v623, 0.0
        %vm640 = vcmp.gt.f32.partialorder %v624, 0.0
        %vm641 = vcmp.gt.f32.partialorder %v625, 0.0
        %vm642 = vcmp.gt.f32.partialorder %v626, 0.0
        %v643 = vmul.f32 %v611, 0.01
        %v644 = vmul.f32 %v612, 0.01
        %v645 = vmul.f32 %v613, 0.01
        %v646 = vmul.f32 %v614, 0.01
        %v647 = vmul.f32 %v615, 0.01
        %v648 = vmul.f32 %v616, 0.01
        %v649 = vmul.f32 %v617, 0.01
        %v650 = vmul.f32 %v618, 0.01
        %v651 = vmul.f32 %v619, 0.01
        %v652 = vmul.f32 %v620, 0.01
        %v653 = vmul.f32 %v621, 0.01
        %v654 = vmul.f32 %v622, 0.01
        %v655 = vmul.f32 %v623, 0.01
        %v656 = vmul.f32 %v624, 0.01
        %v657 = vmul.f32 %v625, 0.01
        %v658 = vmul.f32 %v626, 0.01
        %v659 = vsel %vm627, %v611, %v643
        %v660 = vsel %vm628, %v612, %v644
        %v661 = vsel %vm629, %v613, %v645
        %v662 = vsel %vm630, %v614, %v646
        %v663 = vsel %vm631, %v615, %v647
        %v664 = vsel %vm632, %v616, %v648
        %v665 = vsel %vm633, %v617, %v649
        %v666 = vsel %vm634, %v618, %v650
        %v667 = vsel %vm635, %v619, %v651
        %v668 = vsel %vm636, %v620, %v652
        %v669 = vsel %vm637, %v621, %v653
        %v670 = vsel %vm638, %v622, %v654
        %v671 = vsel %vm639, %v623, %v655
        %v672 = vsel %vm640, %v624, %v656
        %v673 = vsel %vm641, %v625, %v657
        %v674 = vsel %vm642, %v626, %v658
        %v675 = vadd.f32 %v659, %v663
        %v676 = vadd.f32 %v675, %v667
        %v677 = vadd.f32 %v676, %v671
        %v678 = vrot.slane %v677, 4
        %v679 = vadd.f32 %v677, %v678
        %v680 = vrot.slane %v679, 2
        %v681 = vadd.f32 %v679, %v680
        %v682 = vrot.slane %v681, 1
        %v683 = vadd.f32 %v681, %v682
        %v684 = vadd.f32 %v660, %v664
        %v685 = vadd.f32 %v684, %v668
        %v686 = vadd.f32 %v685, %v672
        %v687 = vrot.slane %v686, 4
        %v688 = vadd.f32 %v686, %v687
        %v689 = vrot.slane %v688, 2
        %v690 = vadd.f32 %v688, %v689
        %v691 = vrot.slane %v690, 1
        %v692 = vadd.f32 %v690, %v691
        %v693 = vadd.f32 %v661, %v665
        %v694 = vadd.f32 %v693, %v669
        %v695 = vadd.f32 %v694, %v673
        %v696 = vrot.slane %v695, 4
        %v697 = vadd.f32 %v695, %v696
        %v698 = vrot.slane %v697, 2
        %v699 = vadd.f32 %v697, %v698
        %v700 = vrot.slane %v699, 1
        %v701 = vadd.f32 %v699, %v700
        %v702 = vadd.f32 %v662, %v666
        %v703 = vadd.f32 %v702, %v670
        %v704 = vadd.f32 %v703, %v674
        %v705 = vrot.slane %v704, 4
        %v706 = vadd.f32 %v704, %v705
        %v707 = vrot.slane %v706, 2
        %v708 = vadd.f32 %v706, %v707
        %v709 = vrot.slane %v708, 1
        %v710 = vadd.f32 %v708, %v709
        %v711 = vrcp.pop 32.0
        %v712 = vmul.f32 %v683, %v711
        %v713 = vmul.f32 %v692, %v711
        %v714 = vmul.f32 %v701, %v711
        %v715 = vmul.f32 %v710, %v711
        %v716 = vmul.f32 %v659, %v659
        %v717 = vmul.f32 %v660, %v660
        %v718 = vmul.f32 %v661, %v661
        %v719 = vmul.f32 %v662, %v662
        %v720 = vmul.f32 %v663, %v663
        %v721 = vmul.f32 %v664, %v664
        %v722 = vmul.f32 %v665, %v665
        %v723 = vmul.f32 %v666, %v666
        %v724 = vmul.f32 %v667, %v667
        %v725 = vmul.f32 %v668, %v668
        %v726 = vmul.f32 %v669, %v669
        %v727 = vmul.f32 %v670, %v670
        %v728 = vmul.f32 %v671, %v671
        %v729 = vmul.f32 %v672, %v672
        %v730 = vmul.f32 %v673, %v673
        %v731 = vmul.f32 %v674, %v674
        %v732 = vadd.f32 %v716, %v720
        %v733 = vadd.f32 %v732, %v724
        %v734 = vadd.f32 %v733, %v728
        %v735 = vrot.slane %v734, 4
        %v736 = vadd.f32 %v734, %v735
        %v737 = vrot.slane %v736, 2
        %v738 = vadd.f32 %v736, %v737
        %v739 = vrot.slane %v738, 1
        %v740 = vadd.f32 %v738, %v739
        %v741 = vadd.f32 %v717, %v721
        %v742 = vadd.f32 %v741, %v725
        %v743 = vadd.f32 %v742, %v729
        %v744 = vrot.slane %v743, 4
        %v745 = vadd.f32 %v743, %v744
        %v746 = vrot.slane %v745, 2
        %v747 = vadd.f32 %v745, %v746
        %v748 = vrot.slane %v747, 1
        %v749 = vadd.f32 %v747, %v748
        %v750 = vadd.f32 %v718, %v722
        %v751 = vadd.f32 %v750, %v726
        %v752 = vadd.f32 %v751, %v730
        %v753 = vrot.slane %v752, 4
        %v754 = vadd.f32 %v752, %v753
        %v755 = vrot.slane %v754, 2
        %v756 = vadd.f32 %v754, %v755
        %v757 = vrot.slane %v756, 1
        %v758 = vadd.f32 %v756, %v757
        %v759 = vadd.f32 %v719, %v723
        %v760 = vadd.f32 %v759, %v727
        %v761 = vadd.f32 %v760, %v731
        %v762 = vrot.slane %v761, 4
        %v763 = vadd.f32 %v761, %v762
        %v764 = vrot.slane %v763, 2
        %v765 = vadd.f32 %v763, %v764
        %v766 = vrot.slane %v765, 1
        %v767 = vadd.f32 %v765, %v766
        %v768 = vmul.f32 %v740, %v711
        %v769 = vmul.f32 %v749, %v711
        %v770 = vmul.f32 %v758, %v711
        %v771 = vmul.f32 %v767, %v711
        %v772 = vmul.f32 %v712, %v712
        %v773 = vmul.f32 %v713, %v713
        %v774 = vmul.f32 %v714, %v714
        %v775 = vmul.f32 %v715, %v715
        %v776 = vsub.f32 %v768, %v772
        %v777 = vsub.f32 %v769, %v773
        %v778 = vsub.f32 %v770, %v774
        %v779 = vsub.f32 %v771, %v775
        %v780 = vmax.f32 %v776, 0.0
        %v781 = vmax.f32 %v777, 0.0
        %v782 = vmax.f32 %v778, 0.0
        %v783 = vmax.f32 %v779, 0.0
        %v784 = vsub.f32 %v659, %v712
        %v785 = vsub.f32 %v660, %v713
        %v786 = vsub.f32 %v661, %v714
        %v787 = vsub.f32 %v662, %v715
        %v788 = vsub.f32 %v663, %v712
        %v789 = vsub.f32 %v664, %v713
        %v790 = vsub.f32 %v665, %v714
        %v791 = vsub.f32 %v666, %v715
        %v792 = vsub.f32 %v667, %v712
        %v793 = vsub.f32 %v668, %v713
        %v794 = vsub.f32 %v669, %v714
        %v795 = vsub.f32 %v670, %v715
        %v796 = vsub.f32 %v671, %v712
        %v797 = vsub.f32 %v672, %v713
        %v798 = vsub.f32 %v673, %v714
        %v799 = vsub.f32 %v674, %v715
        %v800 = vadd.f32 %v780, 1e-05
        %v801 = vadd.f32 %v781, 1e-05
        %v802 = vadd.f32 %v782, 1e-05
        %v803 = vadd.f32 %v783, 1e-05
        %v804 = vrsqrt.pop %v800
        %v805 = vrsqrt.pop %v801
        %v806 = vrsqrt.pop %v802
        %v807 = vrsqrt.pop %v803
        %v808 = vmul.f32 %v784, %v804
        %v809 = vmul.f32 %v785, %v805
        %v810 = vmul.f32 %v786, %v806
        %v811 = vmul.f32 %v787, %v807
        %v812 = vmul.f32 %v788, %v804
        %v813 = vmul.f32 %v789, %v805
        %v814 = vmul.f32 %v790, %v806
        %v815 = vmul.f32 %v791, %v807
        %v816 = vmul.f32 %v792, %v804
        %v817 = vmul.f32 %v793, %v805
        %v818 = vmul.f32 %v794, %v806
        %v819 = vmul.f32 %v795, %v807
        %v820 = vmul.f32 %v796, %v804
        %v821 = vmul.f32 %v797, %v805
        %v822 = vmul.f32 %v798, %v806
        %v823 = vmul.f32 %v799, %v807
        %824 = vset.pattern.permute.xlu0 1
        %825 = vperm.xlu0 %824, %v261
        %v826 = vpop.permute.xlu0 %825
        %828 = vset.pattern.permute.xlu0 1
        %829 = vperm.xlu0 %828, %v262
        %v830 = vpop.permute.xlu0 %829
        %832 = vset.pattern.permute.xlu0 1
        %833 = vperm.xlu0 %832, %v263
        %v834 = vpop.permute.xlu0 %833
        %836 = vset.pattern.permute.xlu0 1
        %837 = vperm.xlu0 %836, %v264
        %v838 = vpop.permute.xlu0 %837
        %v840 = vmul.f32 %v808, %v826
        %v841 = vmul.f32 %v809, %v826
        %v842 = vmul.f32 %v810, %v826
        %v843 = vmul.f32 %v811, %v826
        %v844 = vmul.f32 %v812, %v830
        %v845 = vmul.f32 %v813, %v830
        %v846 = vmul.f32 %v814, %v830
        %v847 = vmul.f32 %v815, %v830
        %v848 = vmul.f32 %v816, %v834
        %v849 = vmul.f32 %v817, %v834
        %v850 = vmul.f32 %v818, %v834
        %v851 = vmul.f32 %v819, %v834
        %v852 = vmul.f32 %v820, %v838
        %v853 = vmul.f32 %v821, %v838
        %v854 = vmul.f32 %v822, %v838
        %v855 = vmul.f32 %v823, %v838
        %856 = vset.pattern.permute.xlu0 2
        %857 = vperm.xlu0 %856, %v261
        %v858 = vpop.permute.xlu0 %857
        %860 = vset.pattern.permute.xlu0 2
        %861 = vperm.xlu0 %860, %v262
        %v862 = vpop.permute.xlu0 %861
        %864 = vset.pattern.permute.xlu0 2
        %865 = vperm.xlu0 %864, %v263
        %v866 = vpop.permute.xlu0 %865
        %868 = vset.pattern.permute.xlu0 2
        %869 = vperm.xlu0 %868, %v264
        %v870 = vpop.permute.xlu0 %869
        %v872 = vadd.f32 %v840, %v858
        %v873 = vadd.f32 %v841, %v858
        %v874 = vadd.f32 %v842, %v858
        %v875 = vadd.f32 %v843, %v858
        %v876 = vadd.f32 %v844, %v862
        %v877 = vadd.f32 %v845, %v862
        %v878 = vadd.f32 %v846, %v862
        %v879 = vadd.f32 %v847, %v862
        %v880 = vadd.f32 %v848, %v866
        %v881 = vadd.f32 %v849, %v866
        %v882 = vadd.f32 %v850, %v866
        %v883 = vadd.f32 %v851, %v866
        %v884 = vadd.f32 %v852, %v870
        %v885 = vadd.f32 %v853, %v870
        %v886 = vadd.f32 %v854, %v870
        %v887 = vadd.f32 %v855, %v870
        %v888 = vld [vmem:[%s2] sm:$0xff]
        %v889 = vld [vmem:[%s2 + $0x8] sm:$0xff]
        %v890 = vld [vmem:[%s2 + $0x10] sm:$0xff]
        %v891 = vld [vmem:[%s2 + $0x18] sm:$0xff]
        %s892 = scalar_lea.vmem %s4, 32
        %v893 = vld [vmem:[%s892] sm:$0xff]
        %v894 = vld [vmem:[%s892 + $0x8] sm:$0xff]
        %v895 = vld [vmem:[%s892 + $0x10] sm:$0xff]
        %v896 = vld [vmem:[%s892 + $0x18] sm:$0xff]
        %898 = vset.pattern.permute.xlu0 0
        %899 = vperm.xlu0 %898, %v893
        %v900 = vpop.permute.xlu0 %899
        %903 = vset.pattern.permute.xlu0 0
        %904 = vperm.xlu0 %903, %v894
        %v905 = vpop.permute.xlu0 %904
        %908 = vset.pattern.permute.xlu0 0
        %909 = vperm.xlu0 %908, %v895
        %v910 = vpop.permute.xlu0 %909
        %913 = vset.pattern.permute.xlu0 0
        %914 = vperm.xlu0 %913, %v896
        %v915 = vpop.permute.xlu0 %914
        %vm917 = vcmask 261120
        %v919 = vsel %vm917, %v888, 0
        %v922 = vsel %vm917, %v889, 0
        %v925 = vsel %vm917, %v890, 0
        %v928 = vsel %vm917, %v891, 0
        %930 = vmatprep.subr.mxu0 %v873
        %931 = vmatpush1.msra.mxu0 %v872
        %932 = vmatprep.subr.mxu0 %v877
        %933 = vmatpush1.msra.mxu0 %v876
        %934 = vmatprep.subr.mxu0 %v881
        %935 = vmatpush1.msra.mxu0 %v880
        %936 = vmatprep.subr.mxu0 %v885
        %937 = vmatpush1.msra.mxu0 %v884
        %938 = vmatprep.subr.mxu0 0.0
        %939 = vmatpush1.msra.mxu0 0.0
        %940 = vmatprep.subr.mxu0 0.0
        %941 = vmatpush1.msra.mxu0 0.0
        %942 = vmatprep.subr.mxu0 0.0
        %943 = vmatpush1.msra.mxu0 0.0
        %944 = vmatprep.subr.mxu0 0.0
        %945 = vmatpush1.msra.mxu0 0.0
        %946 = vmatprep.subr.mxu0 0.0
        %947 = vmatpush1.msra.mxu0 0.0
        %948 = vmatprep.subr.mxu0 0.0
        %949 = vmatpush1.msra.mxu0 0.0
        %950 = vmatprep.subr.mxu0 0.0
        %951 = vmatpush1.msra.mxu0 0.0
        %952 = vmatprep.subr.mxu0 0.0
        %953 = vmatpush1.msra.mxu0 0.0
        %954 = vmatprep.subr.mxu0 0.0
        %955 = vmatpush1.msra.mxu0 0.0
        %956 = vmatprep.subr.mxu0 0.0
        %957 = vmatpush1.msra.mxu0 0.0
        %958 = vmatprep.subr.mxu0 0.0
        %959 = vmatpush1.msra.mxu0 0.0
        %960 = vmatprep.subr.mxu0 0.0
        %961 = vmatpush1.msra.mxu0 0.0
        %962 = vmatprep.subr.mxu0 0.0
        %963 = vmatpush1.msra.mxu0 0.0
        %964 = vmatprep.subr.mxu0 0.0
        %965 = vmatpush1.msra.mxu0 0.0
        %966 = vmatprep.subr.mxu0 0.0
        %967 = vmatpush1.msra.mxu0 0.0
        %968 = vmatprep.subr.mxu0 0.0
        %969 = vmatpush1.msra.mxu0 0.0
        %970 = vmatprep.subr.mxu0 0.0
        %971 = vmatpush1.msra.mxu0 0.0
        %972 = vmatprep.subr.mxu0 0.0
        %973 = vmatpush1.msra.mxu0 0.0
        %974 = vmatprep.subr.mxu0 0.0
        %975 = vmatpush1.msra.mxu0 0.0
        %976 = vmatprep.subr.mxu0 0.0
        %977 = vmatpush1.msra.mxu0 0.0
        %978 = vmatprep.subr.mxu0 0.0
        %979 = vmatpush1.msra.mxu0 0.0
        %980 = vmatprep.subr.mxu0 0.0
        %981 = vmatpush1.msra.mxu0 0.0
        %982 = vmatprep.subr.mxu0 0.0
        %983 = vmatpush1.msra.mxu0 0.0
        %984 = vmatprep.subr.mxu0 0.0
        %985 = vmatpush1.msra.mxu0 0.0
        %986 = vmatprep.subr.mxu0 0.0
        %987 = vmatpush1.msra.mxu0 0.0
        %988 = vmatprep.subr.mxu0 0.0
        %989 = vmatpush1.msra.mxu0 0.0
        %990 = vmatprep.subr.mxu0 0.0
        %991 = vmatpush1.msra.mxu0 0.0
        %992 = vmatprep.subr.mxu0 0.0
        %993 = vmatpush1.msra.mxu0 0.0
        %994 = vmatprep.mubr.f32.mxu0 0.0
        %995 = vmatmul.mubr.f32.gmra.mrb[0].mxu0 %v919
        %v996 = vpop.f32.mrb[0].mxu0
        %v997 = vadd.f32 %v900, %v996
        %v998 = vpop.f32.mrb[0].mxu0
        %v999 = vadd.f32 %v900, %v998
        %1000 = vmatprep.mubr.f32.mxu0 0.0
        %1001 = vmatmul.mubr.f32.gmra.mrb[0].mxu0 %v922
        %v1002 = vpop.f32.mrb[0].mxu0
        %v1003 = vadd.f32 %v905, %v1002
        %v1004 = vpop.f32.mrb[0].mxu0
        %v1005 = vadd.f32 %v905, %v1004
        %1006 = vmatprep.mubr.f32.mxu0 0.0
        %1007 = vmatmul.mubr.f32.gmra.mrb[0].mxu0 %v925
        %v1008 = vpop.f32.mrb[0].mxu0
        %v1009 = vadd.f32 %v910, %v1008
        %v1010 = vpop.f32.mrb[0].mxu0
        %v1011 = vadd.f32 %v910, %v1010
        %1012 = vmatprep.mubr.f32.mxu0 0.0
        %1013 = vmatmul.mubr.f32.gmra.mrb[0].mxu0 %v928
        %v1014 = vpop.f32.mrb[0].mxu0
        %v1015 = vadd.f32 %v915, %v1014
        %v1016 = vpop.f32.mrb[0].mxu0
        %v1017 = vadd.f32 %v915, %v1016
        %1018 = vdwg.mxu0
        %1019 = vmatprep.subr.mxu0 %v875
        %1020 = vmatpush1.msra.mxu0 %v874
        %1021 = vmatprep.subr.mxu0 %v879
        %1022 = vmatpush1.msra.mxu0 %v878
        %1023 = vmatprep.subr.mxu0 %v883
        %1024 = vmatpush1.msra.mxu0 %v882
        %1025 = vmatprep.subr.mxu0 %v887
        %1026 = vmatpush1.msra.mxu0 %v886
        %1027 = vmatprep.subr.mxu0 0.0
        %1028 = vmatpush1.msra.mxu0 0.0
        %1029 = vmatprep.subr.mxu0 0.0
        %1030 = vmatpush1.msra.mxu0 0.0
        %1031 = vmatprep.subr.mxu0 0.0
        %1032 = vmatpush1.msra.mxu0 0.0
        %1033 = vmatprep.subr.mxu0 0.0
        %1034 = vmatpush1.msra.mxu0 0.0
        %1035 = vmatprep.subr.mxu0 0.0
        %1036 = vmatpush1.msra.mxu0 0.0
        %1037 = vmatprep.subr.mxu0 0.0
        %1038 = vmatpush1.msra.mxu0 0.0
        %1039 = vmatprep.subr.mxu0 0.0
        %1040 = vmatpush1.msra.mxu0 0.0
        %1041 = vmatprep.subr.mxu0 0.0
        %1042 = vmatpush1.msra.mxu0 0.0
        %1043 = vmatprep.subr.mxu0 0.0
        %1044 = vmatpush1.msra.mxu0 0.0
        %1045 = vmatprep.subr.mxu0 0.0
        %1046 = vmatpush1.msra.mxu0 0.0
        %1047 = vmatprep.subr.mxu0 0.0
        %1048 = vmatpush1.msra.mxu0 0.0
        %1049 = vmatprep.subr.mxu0 0.0
        %1050 = vmatpush1.msra.mxu0 0.0
        %1051 = vmatprep.subr.mxu0 0.0
        %1052 = vmatpush1.msra.mxu0 0.0
        %1053 = vmatprep.subr.mxu0 0.0
        %1054 = vmatpush1.msra.mxu0 0.0
        %1055 = vmatprep.subr.mxu0 0.0
        %1056 = vmatpush1.msra.mxu0 0.0
        %1057 = vmatprep.subr.mxu0 0.0
        %1058 = vmatpush1.msra.mxu0 0.0
        %1059 = vmatprep.subr.mxu0 0.0
        %1060 = vmatpush1.msra.mxu0 0.0
        %1061 = vmatprep.subr.mxu0 0.0
        %1062 = vmatpush1.msra.mxu0 0.0
        %1063 = vmatprep.subr.mxu0 0.0
        %1064 = vmatpush1.msra.mxu0 0.0
        %1065 = vmatprep.subr.mxu0 0.0
        %1066 = vmatpush1.msra.mxu0 0.0
        %1067 = vmatprep.subr.mxu0 0.0
        %1068 = vmatpush1.msra.mxu0 0.0
        %1069 = vmatprep.subr.mxu0 0.0
        %1070 = vmatpush1.msra.mxu0 0.0
        %1071 = vmatprep.subr.mxu0 0.0
        %1072 = vmatpush1.msra.mxu0 0.0
        %1073 = vmatprep.subr.mxu0 0.0
        %1074 = vmatpush1.msra.mxu0 0.0
        %1075 = vmatprep.subr.mxu0 0.0
        %1076 = vmatpush1.msra.mxu0 0.0
        %1077 = vmatprep.subr.mxu0 0.0
        %1078 = vmatpush1.msra.mxu0 0.0
        %1079 = vmatprep.subr.mxu0 0.0
        %1080 = vmatpush1.msra.mxu0 0.0
        %1081 = vmatprep.subr.mxu0 0.0
        %1082 = vmatpush1.msra.mxu0 0.0
        %1083 = vmatprep.mubr.f32.mxu0 0.0
        %1084 = vmatmul.mubr.f32.gmra.mrb[0].mxu0 %v919
        %v1085 = vpop.f32.mrb[0].mxu0
        %v1086 = vadd.f32 %v900, %v1085
        %v1087 = vpop.f32.mrb[0].mxu0
        %v1088 = vadd.f32 %v900, %v1087
        %1089 = vmatprep.mubr.f32.mxu0 0.0
        %1090 = vmatmul.mubr.f32.gmra.mrb[0].mxu0 %v922
        %v1091 = vpop.f32.mrb[0].mxu0
        %v1092 = vadd.f32 %v905, %v1091
        %v1093 = vpop.f32.mrb[0].mxu0
        %v1094 = vadd.f32 %v905, %v1093
        %1095 = vmatprep.mubr.f32.mxu0 0.0
        %1096 = vmatmul.mubr.f32.gmra.mrb[0].mxu0 %v925
        %v1097 = vpop.f32.mrb[0].mxu0
        %v1098 = vadd.f32 %v910, %v1097
        %v1099 = vpop.f32.mrb[0].mxu0
        %v1100 = vadd.f32 %v910, %v1099
        %1101 = vmatprep.mubr.f32.mxu0 0.0
        %1102 = vmatmul.mubr.f32.gmra.mrb[0].mxu0 %v928
        %v1103 = vpop.f32.mrb[0].mxu0
        %v1104 = vadd.f32 %v915, %v1103
        %v1105 = vpop.f32.mrb[0].mxu0
        %v1106 = vadd.f32 %v915, %v1105
        %1107 = vdwg.mxu0
        %vm1108 = vcmp.gt.f32.partialorder %v997, 0.0
        %vm1109 = vcmp.gt.f32.partialorder %v999, 0.0
        %vm1110 = vcmp.gt.f32.partialorder %v1086, 0.0
        %vm1111 = vcmp.gt.f32.partialorder %v1088, 0.0
        %vm1112 = vcmp.gt.f32.partialorder %v1003, 0.0
        %vm1113 = vcmp.gt.f32.partialorder %v1005, 0.0
        %vm1114 = vcmp.gt.f32.partialorder %v1092, 0.0
        %vm1115 = vcmp.gt.f32.partialorder %v1094, 0.0
        %vm1116 = vcmp.gt.f32.partialorder %v1009, 0.0
        %vm1117 = vcmp.gt.f32.partialorder %v1011, 0.0
        %vm1118 = vcmp.gt.f32.partialorder %v1098, 0.0
        %vm1119 = vcmp.gt.f32.partialorder %v1100, 0.0
        %vm1120 = vcmp.gt.f32.partialorder %v1015, 0.0
        %vm1121 = vcmp.gt.f32.partialorder %v1017, 0.0
        %vm1122 = vcmp.gt.f32.partialorder %v1104, 0.0
        %vm1123 = vcmp.gt.f32.partialorder %v1106, 0.0
        %v1124 = vmul.f32 %v997, 0.01
        %v1125 = vmul.f32 %v999, 0.01
        %v1126 = vmul.f32 %v1086, 0.01
        %v1127 = vmul.f32 %v1088, 0.01
        %v1128 = vmul.f32 %v1003, 0.01
        %v1129 = vmul.f32 %v1005, 0.01
        %v1130 = vmul.f32 %v1092, 0.01
        %v1131 = vmul.f32 %v1094, 0.01
        %v1132 = vmul.f32 %v1009, 0.01
        %v1133 = vmul.f32 %v1011, 0.01
        %v1134 = vmul.f32 %v1098, 0.01
        %v1135 = vmul.f32 %v1100, 0.01
        %v1136 = vmul.f32 %v1015, 0.01
        %v1137 = vmul.f32 %v1017, 0.01
        %v1138 = vmul.f32 %v1104, 0.01
        %v1139 = vmul.f32 %v1106, 0.01
        %v1140 = vsel %vm1108, %v997, %v1124
        %v1141 = vsel %vm1109, %v999, %v1125
        %v1142 = vsel %vm1110, %v1086, %v1126
        %v1143 = vsel %vm1111, %v1088, %v1127
        %v1144 = vsel %vm1112, %v1003, %v1128
        %v1145 = vsel %vm1113, %v1005, %v1129
        %v1146 = vsel %vm1114, %v1092, %v1130
        %v1147 = vsel %vm1115, %v1094, %v1131
        %v1148 = vsel %vm1116, %v1009, %v1132
        %v1149 = vsel %vm1117, %v1011, %v1133
        %v1150 = vsel %vm1118, %v1098, %v1134
        %v1151 = vsel %vm1119, %v1100, %v1135
        %v1152 = vsel %vm1120, %v1015, %v1136
        %v1153 = vsel %vm1121, %v1017, %v1137
        %v1154 = vsel %vm1122, %v1104, %v1138
        %v1155 = vsel %vm1123, %v1106, %v1139
        %v1156 = vadd.f32 %v1140, %v1144
        %v1157 = vadd.f32 %v1156, %v1148
        %v1158 = vadd.f32 %v1157, %v1152
        %v1159 = vrot.slane %v1158, 4
        %v1160 = vadd.f32 %v1158, %v1159
        %v1161 = vrot.slane %v1160, 2
        %v1162 = vadd.f32 %v1160, %v1161
        %v1163 = vrot.slane %v1162, 1
        %v1164 = vadd.f32 %v1162, %v1163
        %v1165 = vadd.f32 %v1141, %v1145
        %v1166 = vadd.f32 %v1165, %v1149
        %v1167 = vadd.f32 %v1166, %v1153
        %v1168 = vrot.slane %v1167, 4
        %v1169 = vadd.f32 %v1167, %v1168
        %v1170 = vrot.slane %v1169, 2
        %v1171 = vadd.f32 %v1169, %v1170
        %v1172 = vrot.slane %v1171, 1
        %v1173 = vadd.f32 %v1171, %v1172
        %v1174 = vadd.f32 %v1142, %v1146
        %v1175 = vadd.f32 %v1174, %v1150
        %v1176 = vadd.f32 %v1175, %v1154
        %v1177 = vrot.slane %v1176, 4
        %v1178 = vadd.f32 %v1176, %v1177
        %v1179 = vrot.slane %v1178, 2
        %v1180 = vadd.f32 %v1178, %v1179
        %v1181 = vrot.slane %v1180, 1
        %v1182 = vadd.f32 %v1180, %v1181
        %v1183 = vadd.f32 %v1143, %v1147
        %v1184 = vadd.f32 %v1183, %v1151
        %v1185 = vadd.f32 %v1184, %v1155
        %v1186 = vrot.slane %v1185, 4
        %v1187 = vadd.f32 %v1185, %v1186
        %v1188 = vrot.slane %v1187, 2
        %v1189 = vadd.f32 %v1187, %v1188
        %v1190 = vrot.slane %v1189, 1
        %v1191 = vadd.f32 %v1189, %v1190
        %v1192 = vmul.f32 %v1164, %v711
        %v1193 = vmul.f32 %v1173, %v711
        %v1194 = vmul.f32 %v1182, %v711
        %v1195 = vmul.f32 %v1191, %v711
        %v1196 = vmul.f32 %v1140, %v1140
        %v1197 = vmul.f32 %v1141, %v1141
        %v1198 = vmul.f32 %v1142, %v1142
        %v1199 = vmul.f32 %v1143, %v1143
        %v1200 = vmul.f32 %v1144, %v1144
        %v1201 = vmul.f32 %v1145, %v1145
        %v1202 = vmul.f32 %v1146, %v1146
        %v1203 = vmul.f32 %v1147, %v1147
        %v1204 = vmul.f32 %v1148, %v1148
        %v1205 = vmul.f32 %v1149, %v1149
        %v1206 = vmul.f32 %v1150, %v1150
        %v1207 = vmul.f32 %v1151, %v1151
        %v1208 = vmul.f32 %v1152, %v1152
        %v1209 = vmul.f32 %v1153, %v1153
        %v1210 = vmul.f32 %v1154, %v1154
        %v1211 = vmul.f32 %v1155, %v1155
        %v1212 = vadd.f32 %v1196, %v1200
        %v1213 = vadd.f32 %v1212, %v1204
        %v1214 = vadd.f32 %v1213, %v1208
        %v1215 = vrot.slane %v1214, 4
        %v1216 = vadd.f32 %v1214, %v1215
        %v1217 = vrot.slane %v1216, 2
        %v1218 = vadd.f32 %v1216, %v1217
        %v1219 = vrot.slane %v1218, 1
        %v1220 = vadd.f32 %v1218, %v1219
        %v1221 = vadd.f32 %v1197, %v1201
        %v1222 = vadd.f32 %v1221, %v1205
        %v1223 = vadd.f32 %v1222, %v1209
        %v1224 = vrot.slane %v1223, 4
        %v1225 = vadd.f32 %v1223, %v1224
        %v1226 = vrot.slane %v1225, 2
        %v1227 = vadd.f32 %v1225, %v1226
        %v1228 = vrot.slane %v1227, 1
        %v1229 = vadd.f32 %v1227, %v1228
        %v1230 = vadd.f32 %v1198, %v1202
        %v1231 = vadd.f32 %v1230, %v1206
        %v1232 = vadd.f32 %v1231, %v1210
        %v1233 = vrot.slane %v1232, 4
        %v1234 = vadd.f32 %v1232, %v1233
        %v1235 = vrot.slane %v1234, 2
        %v1236 = vadd.f32 %v1234, %v1235
        %v1237 = vrot.slane %v1236, 1
        %v1238 = vadd.f32 %v1236, %v1237
        %v1239 = vadd.f32 %v1199, %v1203
        %v1240 = vadd.f32 %v1239, %v1207
        %v1241 = vadd.f32 %v1240, %v1211
        %v1242 = vrot.slane %v1241, 4
        %v1243 = vadd.f32 %v1241, %v1242
        %v1244 = vrot.slane %v1243, 2
        %v1245 = vadd.f32 %v1243, %v1244
        %v1246 = vrot.slane %v1245, 1
        %v1247 = vadd.f32 %v1245, %v1246
        %v1248 = vmul.f32 %v1220, %v711
        %v1249 = vmul.f32 %v1229, %v711
        %v1250 = vmul.f32 %v1238, %v711
        %v1251 = vmul.f32 %v1247, %v711
        %v1252 = vmul.f32 %v1192, %v1192
        %v1253 = vmul.f32 %v1193, %v1193
        %v1254 = vmul.f32 %v1194, %v1194
        %v1255 = vmul.f32 %v1195, %v1195
        %v1256 = vsub.f32 %v1248, %v1252
        %v1257 = vsub.f32 %v1249, %v1253
        %v1258 = vsub.f32 %v1250, %v1254
        %v1259 = vsub.f32 %v1251, %v1255
        %v1260 = vmax.f32 %v1256, 0.0
        %v1261 = vmax.f32 %v1257, 0.0
        %v1262 = vmax.f32 %v1258, 0.0
        %v1263 = vmax.f32 %v1259, 0.0
        %v1264 = vsub.f32 %v1140, %v1192
        %v1265 = vsub.f32 %v1141, %v1193
        %v1266 = vsub.f32 %v1142, %v1194
        %v1267 = vsub.f32 %v1143, %v1195
        %v1268 = vsub.f32 %v1144, %v1192
        %v1269 = vsub.f32 %v1145, %v1193
        %v1270 = vsub.f32 %v1146, %v1194
        %v1271 = vsub.f32 %v1147, %v1195
        %v1272 = vsub.f32 %v1148, %v1192
        %v1273 = vsub.f32 %v1149, %v1193
        %v1274 = vsub.f32 %v1150, %v1194
        %v1275 = vsub.f32 %v1151, %v1195
        %v1276 = vsub.f32 %v1152, %v1192
        %v1277 = vsub.f32 %v1153, %v1193
        %v1278 = vsub.f32 %v1154, %v1194
        %v1279 = vsub.f32 %v1155, %v1195
        %v1280 = vadd.f32 %v1260, 1e-05
        %v1281 = vadd.f32 %v1261, 1e-05
        %v1282 = vadd.f32 %v1262, 1e-05
        %v1283 = vadd.f32 %v1263, 1e-05
        %v1284 = vrsqrt.pop %v1280
        %v1285 = vrsqrt.pop %v1281
        %v1286 = vrsqrt.pop %v1282
        %v1287 = vrsqrt.pop %v1283
        %v1288 = vmul.f32 %v1264, %v1284
        %v1289 = vmul.f32 %v1265, %v1285
        %v1290 = vmul.f32 %v1266, %v1286
        %v1291 = vmul.f32 %v1267, %v1287
        %v1292 = vmul.f32 %v1268, %v1284
        %v1293 = vmul.f32 %v1269, %v1285
        %v1294 = vmul.f32 %v1270, %v1286
        %v1295 = vmul.f32 %v1271, %v1287
        %v1296 = vmul.f32 %v1272, %v1284
        %v1297 = vmul.f32 %v1273, %v1285
        %v1298 = vmul.f32 %v1274, %v1286
        %v1299 = vmul.f32 %v1275, %v1287
        %v1300 = vmul.f32 %v1276, %v1284
        %v1301 = vmul.f32 %v1277, %v1285
        %v1302 = vmul.f32 %v1278, %v1286
        %v1303 = vmul.f32 %v1279, %v1287
        %1304 = vset.pattern.permute.xlu0 1
        %1305 = vperm.xlu0 %1304, %v893
        %v1306 = vpop.permute.xlu0 %1305
        %1308 = vset.pattern.permute.xlu0 1
        %1309 = vperm.xlu0 %1308, %v894
        %v1310 = vpop.permute.xlu0 %1309
        %1312 = vset.pattern.permute.xlu0 1
        %1313 = vperm.xlu0 %1312, %v895
        %v1314 = vpop.permute.xlu0 %1313
        %1316 = vset.pattern.permute.xlu0 1
        %1317 = vperm.xlu0 %1316, %v896
        %v1318 = vpop.permute.xlu0 %1317
        %v1320 = vmul.f32 %v1288, %v1306
        %v1321 = vmul.f32 %v1289, %v1306
        %v1322 = vmul.f32 %v1290, %v1306
        %v1323 = vmul.f32 %v1291, %v1306
        %v1324 = vmul.f32 %v1292, %v1310
        %v1325 = vmul.f32 %v1293, %v1310
        %v1326 = vmul.f32 %v1294, %v1310
        %v1327 = vmul.f32 %v1295, %v1310
        %v1328 = vmul.f32 %v1296, %v1314
        %v1329 = vmul.f32 %v1297, %v1314
        %v1330 = vmul.f32 %v1298, %v1314
        %v1331 = vmul.f32 %v1299, %v1314
        %v1332 = vmul.f32 %v1300, %v1318
        %v1333 = vmul.f32 %v1301, %v1318
        %v1334 = vmul.f32 %v1302, %v1318
        %v1335 = vmul.f32 %v1303, %v1318
        %1336 = vset.pattern.permute.xlu0 2
        %1337 = vperm.xlu0 %1336, %v893
        %v1338 = vpop.permute.xlu0 %1337
        %1340 = vset.pattern.permute.xlu0 2
        %1341 = vperm.xlu0 %1340, %v894
        %v1342 = vpop.permute.xlu0 %1341
        %1344 = vset.pattern.permute.xlu0 2
        %1345 = vperm.xlu0 %1344, %v895
        %v1346 = vpop.permute.xlu0 %1345
        %1348 = vset.pattern.permute.xlu0 2
        %1349 = vperm.xlu0 %1348, %v896
        %v1350 = vpop.permute.xlu0 %1349
        %v1352 = vadd.f32 %v1320, %v1338
        %v1353 = vadd.f32 %v1321, %v1338
        %v1354 = vadd.f32 %v1322, %v1338
        %v1355 = vadd.f32 %v1323, %v1338
        %v1356 = vadd.f32 %v1324, %v1342
        %v1357 = vadd.f32 %v1325, %v1342
        %v1358 = vadd.f32 %v1326, %v1342
        %v1359 = vadd.f32 %v1327, %v1342
        %v1360 = vadd.f32 %v1328, %v1346
        %v1361 = vadd.f32 %v1329, %v1346
        %v1362 = vadd.f32 %v1330, %v1346
        %v1363 = vadd.f32 %v1331, %v1346
        %v1364 = vadd.f32 %v1332, %v1350
        %v1365 = vadd.f32 %v1333, %v1350
        %v1366 = vadd.f32 %v1334, %v1350
        %v1367 = vadd.f32 %v1335, %v1350
        %v1368 = vld [vmem:[%s3] sm:$0x1]
        %v1369 = vld [vmem:[#allocation2] sm:$0x1]
        %1371 = vset.pattern.permute.xlu0 0
        %1372 = vperm.xlu0 %1371, %v1369
        %v1373 = vpop.permute.xlu0 %1372
        %v1375 = vlaneseq
        %v1376 = vshrl.u32 %v1375, 7
        %v1377 = vsub.s32 0, %v1376
        %v1378 = vrot.slane %v1373, %v1377
        %v1380 = vsel %vm917, %v1368, 0
        %1382 = vmatprep.subr.mxu0 %v1353
        %1383 = vmatpush1.msra.mxu0 %v1352
        %1384 = vmatprep.subr.mxu0 %v1357
        %1385 = vmatpush1.msra.mxu0 %v1356
        %1386 = vmatprep.subr.mxu0 %v1361
        %1387 = vmatpush1.msra.mxu0 %v1360
        %1388 = vmatprep.subr.mxu0 %v1365
        %1389 = vmatpush1.msra.mxu0 %v1364
        %1390 = vmatprep.subr.mxu0 0.0
        %1391 = vmatpush1.msra.mxu0 0.0
        %1392 = vmatprep.subr.mxu0 0.0
        %1393 = vmatpush1.msra.mxu0 0.0
        %1394 = vmatprep.subr.mxu0 0.0
        %1395 = vmatpush1.msra.mxu0 0.0
        %1396 = vmatprep.subr.mxu0 0.0
        %1397 = vmatpush1.msra.mxu0 0.0
        %1398 = vmatprep.subr.mxu0 0.0
        %1399 = vmatpush1.msra.mxu0 0.0
        %1400 = vmatprep.subr.mxu0 0.0
        %1401 = vmatpush1.msra.mxu0 0.0
        %1402 = vmatprep.subr.mxu0 0.0
        %1403 = vmatpush1.msra.mxu0 0.0
        %1404 = vmatprep.subr.mxu0 0.0
        %1405 = vmatpush1.msra.mxu0 0.0
        %1406 = vmatprep.subr.mxu0 0.0
        %1407 = vmatpush1.msra.mxu0 0.0
        %1408 = vmatprep.subr.mxu0 0.0
        %1409 = vmatpush1.msra.mxu0 0.0
        %1410 = vmatprep.subr.mxu0 0.0
        %1411 = vmatpush1.msra.mxu0 0.0
        %1412 = vmatprep.subr.mxu0 0.0
        %1413 = vmatpush1.msra.mxu0 0.0
        %1414 = vmatprep.subr.mxu0 0.0
        %1415 = vmatpush1.msra.mxu0 0.0
        %1416 = vmatprep.subr.mxu0 0.0
        %1417 = vmatpush1.msra.mxu0 0.0
        %1418 = vmatprep.subr.mxu0 0.0
        %1419 = vmatpush1.msra.mxu0 0.0
        %1420 = vmatprep.subr.mxu0 0.0
        %1421 = vmatpush1.msra.mxu0 0.0
        %1422 = vmatprep.subr.mxu0 0.0
        %1423 = vmatpush1.msra.mxu0 0.0
        %1424 = vmatprep.subr.mxu0 0.0
        %1425 = vmatpush1.msra.mxu0 0.0
        %1426 = vmatprep.subr.mxu0 0.0
        %1427 = vmatpush1.msra.mxu0 0.0
        %1428 = vmatprep.subr.mxu0 0.0
        %1429 = vmatpush1.msra.mxu0 0.0
        %1430 = vmatprep.subr.mxu0 0.0
        %1431 = vmatpush1.msra.mxu0 0.0
        %1432 = vmatprep.subr.mxu0 0.0
        %1433 = vmatpush1.msra.mxu0 0.0
        %1434 = vmatprep.subr.mxu0 0.0
        %1435 = vmatpush1.msra.mxu0 0.0
        %1436 = vmatprep.subr.mxu0 0.0
        %1437 = vmatpush1.msra.mxu0 0.0
        %1438 = vmatprep.subr.mxu0 0.0
        %1439 = vmatpush1.msra.mxu0 0.0
        %1440 = vmatprep.subr.mxu0 0.0
        %1441 = vmatpush1.msra.mxu0 0.0
        %1442 = vmatprep.subr.mxu0 0.0
        %1443 = vmatpush1.msra.mxu0 0.0
        %1444 = vmatprep.subr.mxu0 0.0
        %1445 = vmatpush1.msra.mxu0 0.0
        %1446 = vmatprep.mubr.f32.mxu0 0.0
        %1447 = vmatmul.mubr.f32.gmra.mrb[0].mxu0 %v1380
        %v1448 = vpop.f32.mrb[0].mxu0
        %v1449 = vadd.f32 %v1378, %v1448
        %v1450 = vpop.f32.mrb[0].mxu0
        %v1451 = vadd.f32 %v1378, %v1450
        %1452 = vdwg.mxu0
        %1453 = vmatprep.subr.mxu0 %v1355
        %1454 = vmatpush1.msra.mxu0 %v1354
        %1455 = vmatprep.subr.mxu0 %v1359
        %1456 = vmatpush1.msra.mxu0 %v1358
        %1457 = vmatprep.subr.mxu0 %v1363
        %1458 = vmatpush1.msra.mxu0 %v1362
        %1459 = vmatprep.subr.mxu0 %v1367
        %1460 = vmatpush1.msra.mxu0 %v1366
        %1461 = vmatprep.subr.mxu0 0.0
        %1462 = vmatpush1.msra.mxu0 0.0
        %1463 = vmatprep.subr.mxu0 0.0
        %1464 = vmatpush1.msra.mxu0 0.0
        %1465 = vmatprep.subr.mxu0 0.0
        %1466 = vmatpush1.msra.mxu0 0.0
        %1467 = vmatprep.subr.mxu0 0.0
        %1468 = vmatpush1.msra.mxu0 0.0
        %1469 = vmatprep.subr.mxu0 0.0
        %1470 = vmatpush1.msra.mxu0 0.0
        %1471 = vmatprep.subr.mxu0 0.0
        %1472 = vmatpush1.msra.mxu0 0.0
        %1473 = vmatprep.subr.mxu0 0.0
        %1474 = vmatpush1.msra.mxu0 0.0
        %1475 = vmatprep.subr.mxu0 0.0
        %1476 = vmatpush1.msra.mxu0 0.0
        %1477 = vmatprep.subr.mxu0 0.0
        %1478 = vmatpush1.msra.mxu0 0.0
        %1479 = vmatprep.subr.mxu0 0.0
        %1480 = vmatpush1.msra.mxu0 0.0
        %1481 = vmatprep.subr.mxu0 0.0
        %1482 = vmatpush1.msra.mxu0 0.0
        %1483 = vmatprep.subr.mxu0 0.0
        %1484 = vmatpush1.msra.mxu0 0.0
        %1485 = vmatprep.subr.mxu0 0.0
        %1486 = vmatpush1.msra.mxu0 0.0
        %1487 = vmatprep.subr.mxu0 0.0
        %1488 = vmatpush1.msra.mxu0 0.0
        %1489 = vmatprep.subr.mxu0 0.0
        %1490 = vmatpush1.msra.mxu0 0.0
        %1491 = vmatprep.subr.mxu0 0.0
        %1492 = vmatpush1.msra.mxu0 0.0
        %1493 = vmatprep.subr.mxu0 0.0
        %1494 = vmatpush1.msra.mxu0 0.0
        %1495 = vmatprep.subr.mxu0 0.0
        %1496 = vmatpush1.msra.mxu0 0.0
        %1497 = vmatprep.subr.mxu0 0.0
        %1498 = vmatpush1.msra.mxu0 0.0
        %1499 = vmatprep.subr.mxu0 0.0
        %1500 = vmatpush1.msra.mxu0 0.0
        %1501 = vmatprep.subr.mxu0 0.0
        %1502 = vmatpush1.msra.mxu0 0.0
        %1503 = vmatprep.subr.mxu0 0.0
        %1504 = vmatpush1.msra.mxu0 0.0
        %1505 = vmatprep.subr.mxu0 0.0
        %1506 = vmatpush1.msra.mxu0 0.0
        %1507 = vmatprep.subr.mxu0 0.0
        %1508 = vmatpush1.msra.mxu0 0.0
        %1509 = vmatprep.subr.mxu0 0.0
        %1510 = vmatpush1.msra.mxu0 0.0
        %1511 = vmatprep.subr.mxu0 0.0
        %1512 = vmatpush1.msra.mxu0 0.0
        %1513 = vmatprep.subr.mxu0 0.0
        %1514 = vmatpush1.msra.mxu0 0.0
        %1515 = vmatprep.subr.mxu0 0.0
        %1516 = vmatpush1.msra.mxu0 0.0
        %1517 = vmatprep.mubr.f32.mxu0 0.0
        %1518 = vmatmul.mubr.f32.gmra.mrb[0].mxu0 %v1380
        %v1519 = vpop.f32.mrb[0].mxu0
        %v1520 = vadd.f32 %v1378, %v1519
        %v1521 = vpop.f32.mrb[0].mxu0
        %v1522 = vadd.f32 %v1378, %v1521
        %1523 = vdwg.mxu0
        %v1524 = vmax.f32 %v1449, 0.0
        %v1525 = vmax.f32 %v1451, 0.0
        %v1526 = vmax.f32 %v1520, 0.0
        %v1527 = vmax.f32 %v1522, 0.0
        %v1532 = vcombine.low %v1524, %v1525
        %v1533 = vcombine.low %v1526, %v1527
        %v1535 = vunpack.c.l.s4 1966171168
        %v1536 = vunpack.c.0.s8 %v1535
        %v1537 = vlaneseq
        %v1538 = vshrl.u32 %v1537, 7
        %v1539 = vsub.s32 %v1536, %v1538
        %v1540 = vrot.slane %v1532, %v1539
        %v1542 = vunpack.c.l.s4 1966171168
        %v1543 = vunpack.c.0.s8 %v1542
        %v1544 = vlaneseq
        %v1545 = vshrl.u32 %v1544, 7
        %v1546 = vsub.s32 %v1543, %v1545
        %v1547 = vrot.slane %v1533, %v1546
        %v1548 = vcombine.low %v1540, %v1547
        %v1550 = vunpack.c.l.s4 1966171168
        %v1551 = vunpack.c.0.s8 %v1550
        %v1552 = vlaneseq
        %v1553 = vshrl.u32 %v1552, 7
        %v1554 = vsub.s32 %v1551, %v1553
        %v1555 = vrot.slane %v1548, %v1554
        %v1557 = vlaneseq
        %vm1558 = vcmp.ge.s32.totalorder %v1557, 0
        %vm1559 = vcmp.lt.s32.totalorder %v1557, 512
        %vm1560 = vmand %vm1558, %vm1559
        %1561 = vst.msk [vmem:[%s247] sm:$0xf] %vm1560, %v1555
        %s1562 = sand.u32 %s161, 1
        %s1563 = scalar_lea.sflag [#allocation4], %s1562
        %s1564 = sand.u32 %s161, 1
        %s1565 = smul.addr %s1564, 4
        %s1566 = scalar_lea.vmem [#allocation3], %s1565
        // Predicated region
        $region45: #{tpu_custom_call.1} parent=43 // pred_check
          %p1567 = pneg %p171
        $region46: #{tpu_custom_call.1} parent=43 // pred_check_branch
          %1569 = sbr.rel (%p1567) target = $region48
        $region47: #{tpu_custom_call.1} parent=43 // pred_region
          %s1570 = smul.u32 4, %s22
          %s1572 = ssub.s32 64, 64
          %1573 = vsyncadd %s1563, %s1572
          %s1574 = smul.addr %s1570, 16
          %s1575 = scalar_lea.hbm %s6, %s1574
          %s1577 = sshll.u32 %s1566, 4
          %s1578 = int_to_ptr.vmem [resolvable:$true] %s1577
          %1580 = dma.vmem_to_hbm [thread:$0]  %s1578, 64, %s1575, %s1563
        $region48: #{tpu_custom_call.1} parent=43 // pred_fallthru
          _
      $region44: #{tpu_custom_call.1} parent=5 // pred_fallthru
        _
      %p1581 = scmp.le.s32.totalorder 2, %s17
      // Predicated region
      $region49: #{tpu_custom_call.1} parent=5 // pred_check
        %p1582 = pneg %p1581
      $region50: #{tpu_custom_call.1} parent=5 // pred_check_branch
        %1584 = sbr.rel (%p1582) target = $region52
      $region51: #{tpu_custom_call.1} parent=5 // pred_region
        %s1585 = ssub.s32 %s17, 2
        // Predicated region
        $region53: #{tpu_custom_call.1} parent=51 // pred_check
          %p1586 = pneg %p177
        $region54: #{tpu_custom_call.1} parent=51 // pred_check_branch
          %1588 = sbr.rel (%p1586) target = $region56
        $region55: #{tpu_custom_call.1} parent=51 // pred_region
          %s1589 = sand.u32 %s162, 1
          %s1590 = scalar_lea.sflag [#allocation4], %s1589
          %s1591 = sand.u32 %s162, 1
          %s1592 = smul.addr %s1591, 4
          %s1593 = scalar_lea.vmem [#allocation3], %s1592
          %1594 = dma.done %s1590, 64
        $region56: #{tpu_custom_call.1} parent=51 // pred_fallthru
          _
      $region52: #{tpu_custom_call.1} parent=5 // pred_fallthru
        _
    $region6: #{tpu_custom_call.1} parent=1 // loop_footer
      %s21 = sadd.s32 1, %s17
    $region7: #{tpu_custom_call.1} parent=1 // loop_footer_branch
      %16 = sbr.rel target = $region3
    $region8: #{tpu_custom_call.1} parent=1 // loop_exit
      _
    %1595 = vsyncpa [#allocation4], 1
    %s1596 = scalar_lea.sflag [#allocation4], 1
    %1597 = vsyncpa %s1596, 1

</llo_original>
